<compile_context>
chip_gen: v6e
topology: v6e:2x2x1
jax: 0.10.0
libtpu: 0.0.40
codegen_flags: <defaults>
</compile_context>

<pallas_src>
import functools
import math

import jax
import jax.numpy as jnp
from jax import lax
from jax.experimental import pallas as pl
from jax.experimental.pallas import tpu as pltpu


def _entr_loss_kernel(x_ref, y_ref, fy_ref, out_ref, *, k, inv_tau, group_rows,
                      num_groups, block_n, n_valid):
    c_pad = x_ref.shape[1]
    neg_inf = jnp.float32(-jnp.inf)
    # (1, c_pad) iota; broadcast against (G, 1) operands instead of
    # materializing a (block_n, c_pad) int32 temporary.
    class_iota = lax.broadcasted_iota(jnp.int32, (1, c_pad), 1)
    tile_row0 = pl.program_id(0) * block_n
    need_row_mask = (n_valid % block_n) != 0   # static

    def group_body(r0, acc):
        # One register-blocked slab of `group_rows` rows: everything below runs
        # on vreg-resident values; the only VMEM traffic is this single read.
        xs = x_ref[pl.ds(r0, group_rows), :].astype(jnp.float32)
        if inv_tau is not None:
            xs = xs * inv_tau
        ys = y_ref[pl.ds(r0, group_rows), :]             # (G, 1) int32
        fys = fy_ref[pl.ds(r0, group_rows), :]           # (G, 1) f32 (pre-scaled)
        onehot = class_iota == ys                        # (G, c_pad)

        # Knock out the top-k entries per row (== dropping x_sorted[:, :k]).
        # Exactly one element is removed per step; ties are broken by the
        # HIGHEST class index (reversed stable ascending argsort semantics),
        # so the true class lands on the correct side of the k-boundary.
        # -inf class pads never win the race.
        xw = xs
        for _ in range(k):
            m = jnp.max(xw, axis=-1, keepdims=True)                        # (G,1)
            idx = jnp.max(jnp.where(xw == m, class_iota, -1),
                          axis=-1, keepdims=True)                          # (G,1)
            xw = jnp.where(class_iota == idx, neg_inf, xw)

        # safe_z = clamp(x_tail - fy, max=80); knocked-out entries, class pads
        # and the true class all map to exp(-inf) == 0 (single exp pass, EUP).
        z = jnp.minimum(xw - fys, 80.0)
        contrib = jnp.exp(jnp.where(onehot, neg_inf, z))
        per_row = jnp.log(1.0 + jnp.sum(contrib, axis=-1, keepdims=True))  # (G,1)

        if need_row_mask:
            row_idx = (tile_row0 + r0
                       + lax.broadcasted_iota(jnp.int32, (group_rows, 1), 0))
            per_row = jnp.where(row_idx < n_valid, per_row, 0.0)
        return acc + jnp.sum(per_row, axis=0, keepdims=True)               # (1,1)

    acc0 = jnp.zeros((1, 1), jnp.float32)
    if num_groups <= 8:
        # Short static loop: static slice starts, cheapest addressing.
        acc = acc0
        for g in range(num_groups):
            acc = group_body(g * group_rows, acc)
    else:
        def body(g, a):
            return group_body(pl.multiple_of(g * group_rows, group_rows), a)
        acc = lax.fori_loop(0, num_groups, body, acc0, unroll=2)

    # One partial sum per tile, stored at [0, 0] of an aligned, lane-dense
    # (8, 128) output block (unmasked vector stores, negligible writeback).
    row = lax.broadcasted_iota(jnp.int32, (8, 128), 0)
    lane = lax.broadcasted_iota(jnp.int32, (8, 128), 1)
    out_ref[...] = jnp.where((row == 0) & (lane == 0),
                             jnp.broadcast_to(acc, (8, 128)), 0.0)


def _default_vmem_limit_bytes():
    # Per-generation scoped-VMEM cap: ~3/4 of reported capacity, bounded at
    # 64 MiB (well inside v5e/v6e's 128 MiB; <= v7x's 64 MiB per TensorCore).
    try:
        cap = getattr(pltpu.get_tpu_info(), "vmem_capacity_bytes", None)
        if cap:
            return int(min((int(cap) * 3) // 4, 64 * 1024 * 1024))
    except Exception:
        pass
    return 48 * 1024 * 1024   # conservative fallback, safe on every generation


def entr_loss(x, y, *, k=5, tau=1.0, block_n=None, vmem_limit_bytes=None):
    n, c = x.shape
    assert 0 < k < c, "need 0 < k < n_classes"
    y2 = y.astype(jnp.int32).reshape(n, 1)

    # Statically skip the scale pass when tau == 1.  (For other tau the kernel
    # uses x * (1/tau), which may differ from the reference x / tau by 1 ulp.)
    inv_tau = None if float(tau) == 1.0 else float(1.0 / tau)

    # fy gathered on host (O(N)); pre-scaled consistently with the kernel.
    fy = jnp.take_along_axis(x, y2, axis=1).astype(jnp.float32)
    if inv_tau is not None:
        fy = fy * inv_tau

    # Lane-pad classes to a multiple of 128 with -inf (full-width vregs; pads
    # never win the top-k race and contribute exp(-inf) == 0 to the sum).
    c_pad = pl.cdiv(c, 128) * 128
    if c_pad != c:
        x = jnp.pad(x, ((0, 0), (0, c_pad - c)), constant_values=-jnp.inf)

    # Register-block group size: keep each (group_rows, c_pad) f32 slab within
    # ~8 vregs so the k knockouts mutate registers, not VMEM.
    group_rows = int(max(8, min(32, ((8192 // c_pad) // 8) * 8)))

    if vmem_limit_bytes is None:
        vmem_limit_bytes = _default_vmem_limit_bytes()

    # Double-buffered VMEM cost per batch row: x tile (kept in its HBM dtype,
    # cast in-kernel) + the lane-padded (., 1) y and fy tiles.
    bytes_per_row = 2 * c_pad * x.dtype.itemsize + 2 * (2 * 128 * 4)
    budget = (vmem_limit_bytes * 3) // 4     # headroom for slab temps / scratch

    if block_n is None:
        block_cap = budget // bytes_per_row
        block_cap = max(group_rows, (block_cap // group_rows) * group_rows)
        block_cap = min(block_cap, 4096)
        if n <= group_rows:
            num_tiles = 1
        else:
            # Even number of near-equal tiles keeps both v7x TensorCores busy
            # under dimension_semantics=("parallel",); harmless on 1-TC chips,
            # where the large tiles amortize the ~0.35us/step grid overhead.
            num_tiles = 2 * pl.cdiv(n, 2 * block_cap)
        block_n = pl.cdiv(pl.cdiv(n, num_tiles), group_rows) * group_rows
    else:
        assert block_n % 8 == 0, "block_n must be a multiple of 8"
        group_rows = math.gcd(group_rows, block_n)

    if block_n * bytes_per_row > budget:
        # TODO(synk): for very wide class axes (even the minimum batch tile
        # exceeds the VMEM budget) also tile the class axis: per-chunk
        # candidate top-k combined across chunks, instead of a full row/tile.
        raise ValueError(
            f"EntrLoss Pallas kernel: c_pad={c_pad} is too wide for the "
            f"{vmem_limit_bytes // (1 << 20)} MiB scoped-VMEM budget at a "
            f"{block_n}-row batch tile.")

    # Pad the batch to a multiple of block_n (padded rows masked in-kernel).
    n_pad = pl.cdiv(n, block_n) * block_n
    if n_pad != n:
        x = jnp.pad(x, ((0, n_pad - n), (0, 0)))
        y2 = jnp.pad(y2, ((0, n_pad - n), (0, 0)))
        fy = jnp.pad(fy, ((0, n_pad - n), (0, 0)))
    num_tiles = n_pad // block_n
    num_groups = block_n // group_rows

    partials = pl.pallas_call(
        functools.partial(_entr_loss_kernel, k=k, inv_tau=inv_tau,
                          group_rows=group_rows, num_groups=num_groups,
                          block_n=block_n, n_valid=n),
        out_shape=jax.ShapeDtypeStruct((num_tiles * 8, 128), jnp.float32),
        grid=(num_tiles,),
        in_specs=[
            pl.BlockSpec((block_n, c_pad), lambda i: (i, 0)),
            pl.BlockSpec((block_n, 1), lambda i: (i, 0)),
            pl.BlockSpec((block_n, 1), lambda i: (i, 0)),
        ],
        out_specs=pl.BlockSpec((8, 128), lambda i: (i, 0)),
        compiler_params=pltpu.CompilerParams(
            dimension_semantics=("parallel",),
            vmem_limit_bytes=int(vmem_limit_bytes),
        ),
    )(x, y2, fy)
    # Every non-[0, 0] element of each (8, 128) tile block is zero.
    return jnp.sum(partials) / n


def entr_loss_ref(x, y, *, k=5, tau=1.0):
    # Pure-JAX reference mirroring the PyTorch module semantics.
    x = x / tau
    order = jnp.argsort(x, axis=1)[:, ::-1]               # descending sort idx
    x_sorted = jnp.take_along_axis(x, order, axis=1)
    x_sorted_last = x_sorted[:, k:]
    i_last = order[:, k:]
    fy = jnp.take_along_axis(x, y[:, None], axis=1)
    j_mask = (i_last != y[:, None]).astype(x.dtype)
    safe_z = jnp.minimum(x_sorted_last - fy, 80.0)
    losses = jnp.log(1.0 + jnp.sum(jnp.exp(safe_z) * j_mask, axis=1))
    return losses.mean()


if __name__ == "__main__":
    # Small demo shapes; exercises the class (-inf) pad, the batch pad / row
    # mask, two grid tiles and the register-blocked inner loop.
    n_batch, n_classes, k, tau = 100, 100, 5, 1.0
    key = jax.random.PRNGKey(0)
    kx, ky = jax.random.split(key)
    x = jax.random.normal(kx, (n_batch, n_classes), dtype=jnp.float32)
    y = jax.random.randint(ky, (n_batch,), 0, n_classes, dtype=jnp.int32)

    out = entr_loss(x, y, k=k, tau=tau)
    out = jax.block_until_ready(out)

    ref = entr_loss_ref(x, y, k=k, tau=tau)
    assert jnp.allclose(out, ref, rtol=1e-5, atol=1e-5), (out, ref)
    print("KERNEL_OK")
</pallas_src>

<mosaic_0001>
module attributes {stable_mosaic.version = 11 : i64} {
  func.func @_entr_loss_kernel(%arg0: i32, %arg1: memref<64x128xf32, #tpu.memory_space<vmem>>, %arg2: memref<64x1xi32, #tpu.memory_space<vmem>>, %arg3: memref<64x1xf32, #tpu.memory_space<vmem>>, %arg4: memref<8x128xf32, #tpu.memory_space<vmem>>) attributes {dimension_semantics = [#tpu.dimension_semantics<parallel>], iteration_bounds = array<i64: 2>, scalar_prefetch = 0 : i64, scratch_operands = 0 : i64, tpu.core_type = #tpu.core_type<tc>, window_params = [{transform_indices = @transform_0, window_bounds = array<i64: 64, 128>}, {transform_indices = @transform_1, window_bounds = array<i64: 64, 1>}, {transform_indices = @transform_2, window_bounds = array<i64: 64, 1>}, {transform_indices = @transform_3, window_bounds = array<i64: 8, 128>}]} {
    %0 = tpu.iota {dimensions = array<i32: 1>} : vector<1x128xi32>
    %c64_i32 = arith.constant 64 : i32
    %1 = arith.muli %arg0, %c64_i32 : i32
    %cst = arith.constant 0.000000e+00 : f32
    %2 = vector.broadcast %cst : f32 to vector<1x1xf32>
    %c0 = arith.constant 0 : index
    %c0_0 = arith.constant 0 : index
    %3 = vector.load %arg1[%c0, %c0_0] : memref<64x128xf32, #tpu.memory_space<vmem>>, vector<32x128xf32>
    %c0_1 = arith.constant 0 : index
    %c0_2 = arith.constant 0 : index
    %4 = vector.load %arg2[%c0_1, %c0_2] : memref<64x1xi32, #tpu.memory_space<vmem>>, vector<32x1xi32>
    %c0_3 = arith.constant 0 : index
    %c0_4 = arith.constant 0 : index
    %5 = vector.load %arg3[%c0_3, %c0_4] : memref<64x1xf32, #tpu.memory_space<vmem>>, vector<32x1xf32>
    %6 = vector.broadcast %0 : vector<1x128xi32> to vector<32x128xi32>
    %7 = vector.broadcast %4 : vector<32x1xi32> to vector<32x128xi32>
    %8 = arith.cmpi eq, %6, %7 : vector<32x128xi32>
    %cst_5 = arith.constant dense<0xFF800000> : vector<32xf32>
    %9 = vector.multi_reduction <maximumf>, %3, %cst_5 [1] : vector<32x128xf32> to vector<32xf32>
    %10 = vector.shape_cast %9 : vector<32xf32> to vector<32x1xf32>
    %11 = vector.broadcast %10 : vector<32x1xf32> to vector<32x128xf32>
    %12 = arith.cmpf oeq, %3, %11 : vector<32x128xf32>
    %c-1_i32 = arith.constant -1 : i32
    %13 = vector.shape_cast %0 : vector<1x128xi32> to vector<1x128xi32>
    %14 = vector.broadcast %13 : vector<1x128xi32> to vector<32x128xi32>
    %15 = vector.broadcast %c-1_i32 : i32 to vector<32x128xi32>
    %16 = arith.select %12, %14, %15 : vector<32x128xi1>, vector<32x128xi32>
    %cst_6 = arith.constant dense<-2147483648> : vector<32xi32>
    %17 = vector.multi_reduction <maxsi>, %16, %cst_6 [1] : vector<32x128xi32> to vector<32xi32>
    %18 = vector.shape_cast %17 : vector<32xi32> to vector<32x1xi32>
    %19 = vector.broadcast %0 : vector<1x128xi32> to vector<32x128xi32>
    %20 = vector.broadcast %18 : vector<32x1xi32> to vector<32x128xi32>
    %21 = arith.cmpi eq, %19, %20 : vector<32x128xi32>
    %cst_7 = arith.constant 0xFF800000 : f32
    %22 = vector.broadcast %cst_7 : f32 to vector<32x128xf32>
    %23 = arith.select %21, %22, %3 : vector<32x128xi1>, vector<32x128xf32>
    %cst_8 = arith.constant dense<0xFF800000> : vector<32xf32>
    %24 = vector.multi_reduction <maximumf>, %23, %cst_8 [1] : vector<32x128xf32> to vector<32xf32>
    %25 = vector.shape_cast %24 : vector<32xf32> to vector<32x1xf32>
    %26 = vector.broadcast %25 : vector<32x1xf32> to vector<32x128xf32>
    %27 = arith.cmpf oeq, %23, %26 : vector<32x128xf32>
    %c-1_i32_9 = arith.constant -1 : i32
    %28 = vector.shape_cast %0 : vector<1x128xi32> to vector<1x128xi32>
    %29 = vector.broadcast %28 : vector<1x128xi32> to vector<32x128xi32>
    %30 = vector.broadcast %c-1_i32_9 : i32 to vector<32x128xi32>
    %31 = arith.select %27, %29, %30 : vector<32x128xi1>, vector<32x128xi32>
    %cst_10 = arith.constant dense<-2147483648> : vector<32xi32>
    %32 = vector.multi_reduction <maxsi>, %31, %cst_10 [1] : vector<32x128xi32> to vector<32xi32>
    %33 = vector.shape_cast %32 : vector<32xi32> to vector<32x1xi32>
    %34 = vector.broadcast %0 : vector<1x128xi32> to vector<32x128xi32>
    %35 = vector.broadcast %33 : vector<32x1xi32> to vector<32x128xi32>
    %36 = arith.cmpi eq, %34, %35 : vector<32x128xi32>
    %cst_11 = arith.constant 0xFF800000 : f32
    %37 = vector.broadcast %cst_11 : f32 to vector<32x128xf32>
    %38 = arith.select %36, %37, %23 : vector<32x128xi1>, vector<32x128xf32>
    %cst_12 = arith.constant dense<0xFF800000> : vector<32xf32>
    %39 = vector.multi_reduction <maximumf>, %38, %cst_12 [1] : vector<32x128xf32> to vector<32xf32>
    %40 = vector.shape_cast %39 : vector<32xf32> to vector<32x1xf32>
    %41 = vector.broadcast %40 : vector<32x1xf32> to vector<32x128xf32>
    %42 = arith.cmpf oeq, %38, %41 : vector<32x128xf32>
    %c-1_i32_13 = arith.constant -1 : i32
    %43 = vector.shape_cast %0 : vector<1x128xi32> to vector<1x128xi32>
    %44 = vector.broadcast %43 : vector<1x128xi32> to vector<32x128xi32>
    %45 = vector.broadcast %c-1_i32_13 : i32 to vector<32x128xi32>
    %46 = arith.select %42, %44, %45 : vector<32x128xi1>, vector<32x128xi32>
    %cst_14 = arith.constant dense<-2147483648> : vector<32xi32>
    %47 = vector.multi_reduction <maxsi>, %46, %cst_14 [1] : vector<32x128xi32> to vector<32xi32>
    %48 = vector.shape_cast %47 : vector<32xi32> to vector<32x1xi32>
    %49 = vector.broadcast %0 : vector<1x128xi32> to vector<32x128xi32>
    %50 = vector.broadcast %48 : vector<32x1xi32> to vector<32x128xi32>
    %51 = arith.cmpi eq, %49, %50 : vector<32x128xi32>
    %cst_15 = arith.constant 0xFF800000 : f32
    %52 = vector.broadcast %cst_15 : f32 to vector<32x128xf32>
    %53 = arith.select %51, %52, %38 : vector<32x128xi1>, vector<32x128xf32>
    %cst_16 = arith.constant dense<0xFF800000> : vector<32xf32>
    %54 = vector.multi_reduction <maximumf>, %53, %cst_16 [1] : vector<32x128xf32> to vector<32xf32>
    %55 = vector.shape_cast %54 : vector<32xf32> to vector<32x1xf32>
    %56 = vector.broadcast %55 : vector<32x1xf32> to vector<32x128xf32>
    %57 = arith.cmpf oeq, %53, %56 : vector<32x128xf32>
    %c-1_i32_17 = arith.constant -1 : i32
    %58 = vector.shape_cast %0 : vector<1x128xi32> to vector<1x128xi32>
    %59 = vector.broadcast %58 : vector<1x128xi32> to vector<32x128xi32>
    %60 = vector.broadcast %c-1_i32_17 : i32 to vector<32x128xi32>
    %61 = arith.select %57, %59, %60 : vector<32x128xi1>, vector<32x128xi32>
    %cst_18 = arith.constant dense<-2147483648> : vector<32xi32>
    %62 = vector.multi_reduction <maxsi>, %61, %cst_18 [1] : vector<32x128xi32> to vector<32xi32>
    %63 = vector.shape_cast %62 : vector<32xi32> to vector<32x1xi32>
    %64 = vector.broadcast %0 : vector<1x128xi32> to vector<32x128xi32>
    %65 = vector.broadcast %63 : vector<32x1xi32> to vector<32x128xi32>
    %66 = arith.cmpi eq, %64, %65 : vector<32x128xi32>
    %cst_19 = arith.constant 0xFF800000 : f32
    %67 = vector.broadcast %cst_19 : f32 to vector<32x128xf32>
    %68 = arith.select %66, %67, %53 : vector<32x128xi1>, vector<32x128xf32>
    %cst_20 = arith.constant dense<0xFF800000> : vector<32xf32>
    %69 = vector.multi_reduction <maximumf>, %68, %cst_20 [1] : vector<32x128xf32> to vector<32xf32>
    %70 = vector.shape_cast %69 : vector<32xf32> to vector<32x1xf32>
    %71 = vector.broadcast %70 : vector<32x1xf32> to vector<32x128xf32>
    %72 = arith.cmpf oeq, %68, %71 : vector<32x128xf32>
    %c-1_i32_21 = arith.constant -1 : i32
    %73 = vector.shape_cast %0 : vector<1x128xi32> to vector<1x128xi32>
    %74 = vector.broadcast %73 : vector<1x128xi32> to vector<32x128xi32>
    %75 = vector.broadcast %c-1_i32_21 : i32 to vector<32x128xi32>
    %76 = arith.select %72, %74, %75 : vector<32x128xi1>, vector<32x128xi32>
    %cst_22 = arith.constant dense<-2147483648> : vector<32xi32>
    %77 = vector.multi_reduction <maxsi>, %76, %cst_22 [1] : vector<32x128xi32> to vector<32xi32>
    %78 = vector.shape_cast %77 : vector<32xi32> to vector<32x1xi32>
    %79 = vector.broadcast %0 : vector<1x128xi32> to vector<32x128xi32>
    %80 = vector.broadcast %78 : vector<32x1xi32> to vector<32x128xi32>
    %81 = arith.cmpi eq, %79, %80 : vector<32x128xi32>
    %cst_23 = arith.constant 0xFF800000 : f32
    %82 = vector.broadcast %cst_23 : f32 to vector<32x128xf32>
    %83 = arith.select %81, %82, %68 : vector<32x128xi1>, vector<32x128xf32>
    %84 = vector.broadcast %5 : vector<32x1xf32> to vector<32x128xf32>
    %85 = arith.subf %83, %84 : vector<32x128xf32>
    %cst_24 = arith.constant 8.000000e+01 : f32
    %86 = vector.broadcast %cst_24 : f32 to vector<32x128xf32>
    %87 = arith.minimumf %85, %86 : vector<32x128xf32>
    %cst_25 = arith.constant 0xFF800000 : f32
    %88 = vector.broadcast %cst_25 : f32 to vector<32x128xf32>
    %89 = arith.select %8, %88, %87 : vector<32x128xi1>, vector<32x128xf32>
    %90 = math.exp %89 : vector<32x128xf32>
    %cst_26 = arith.constant dense<0.000000e+00> : vector<32xf32>
    %91 = vector.multi_reduction <add>, %90, %cst_26 [1] : vector<32x128xf32> to vector<32xf32>
    %92 = vector.shape_cast %91 : vector<32xf32> to vector<32x1xf32>
    %cst_27 = arith.constant 1.000000e+00 : f32
    %93 = vector.broadcast %cst_27 : f32 to vector<32x1xf32>
    %94 = arith.addf %93, %92 : vector<32x1xf32>
    %95 = math.log %94 : vector<32x1xf32>
    %c0_i32 = arith.constant 0 : i32
    %96 = arith.addi %1, %c0_i32 : i32
    %97 = tpu.iota {dimensions = array<i32: 0>} : vector<32x1xi32>
    %98 = vector.broadcast %96 : i32 to vector<32x1xi32>
    %99 = arith.addi %98, %97 : vector<32x1xi32>
    %c100_i32 = arith.constant 100 : i32
    %100 = vector.broadcast %c100_i32 : i32 to vector<32x1xi32>
    %101 = arith.cmpi slt, %99, %100 : vector<32x1xi32>
    %cst_28 = arith.constant 0.000000e+00 : f32
    %102 = vector.broadcast %cst_28 : f32 to vector<32x1xf32>
    %103 = arith.select %101, %95, %102 : vector<32x1xi1>, vector<32x1xf32>
    %cst_29 = arith.constant dense<0.000000e+00> : vector<1xf32>
    %104 = vector.multi_reduction <add>, %103, %cst_29 [0] : vector<32x1xf32> to vector<1xf32>
    %105 = vector.shape_cast %104 : vector<1xf32> to vector<1x1xf32>
    %106 = arith.addf %2, %105 : vector<1x1xf32>
    %c32 = arith.constant 32 : index
    %c0_30 = arith.constant 0 : index
    %107 = vector.load %arg1[%c32, %c0_30] : memref<64x128xf32, #tpu.memory_space<vmem>>, vector<32x128xf32>
    %c32_31 = arith.constant 32 : index
    %c0_32 = arith.constant 0 : index
    %108 = vector.load %arg2[%c32_31, %c0_32] : memref<64x1xi32, #tpu.memory_space<vmem>>, vector<32x1xi32>
    %c32_33 = arith.constant 32 : index
    %c0_34 = arith.constant 0 : index
    %109 = vector.load %arg3[%c32_33, %c0_34] : memref<64x1xf32, #tpu.memory_space<vmem>>, vector<32x1xf32>
    %110 = vector.broadcast %0 : vector<1x128xi32> to vector<32x128xi32>
    %111 = vector.broadcast %108 : vector<32x1xi32> to vector<32x128xi32>
    %112 = arith.cmpi eq, %110, %111 : vector<32x128xi32>
    %cst_35 = arith.constant dense<0xFF800000> : vector<32xf32>
    %113 = vector.multi_reduction <maximumf>, %107, %cst_35 [1] : vector<32x128xf32> to vector<32xf32>
    %114 = vector.shape_cast %113 : vector<32xf32> to vector<32x1xf32>
    %115 = vector.broadcast %114 : vector<32x1xf32> to vector<32x128xf32>
    %116 = arith.cmpf oeq, %107, %115 : vector<32x128xf32>
    %c-1_i32_36 = arith.constant -1 : i32
    %117 = vector.shape_cast %0 : vector<1x128xi32> to vector<1x128xi32>
    %118 = vector.broadcast %117 : vector<1x128xi32> to vector<32x128xi32>
    %119 = vector.broadcast %c-1_i32_36 : i32 to vector<32x128xi32>
    %120 = arith.select %116, %118, %119 : vector<32x128xi1>, vector<32x128xi32>
    %cst_37 = arith.constant dense<-2147483648> : vector<32xi32>
    %121 = vector.multi_reduction <maxsi>, %120, %cst_37 [1] : vector<32x128xi32> to vector<32xi32>
    %122 = vector.shape_cast %121 : vector<32xi32> to vector<32x1xi32>
    %123 = vector.broadcast %0 : vector<1x128xi32> to vector<32x128xi32>
    %124 = vector.broadcast %122 : vector<32x1xi32> to vector<32x128xi32>
    %125 = arith.cmpi eq, %123, %124 : vector<32x128xi32>
    %cst_38 = arith.constant 0xFF800000 : f32
    %126 = vector.broadcast %cst_38 : f32 to vector<32x128xf32>
    %127 = arith.select %125, %126, %107 : vector<32x128xi1>, vector<32x128xf32>
    %cst_39 = arith.constant dense<0xFF800000> : vector<32xf32>
    %128 = vector.multi_reduction <maximumf>, %127, %cst_39 [1] : vector<32x128xf32> to vector<32xf32>
    %129 = vector.shape_cast %128 : vector<32xf32> to vector<32x1xf32>
    %130 = vector.broadcast %129 : vector<32x1xf32> to vector<32x128xf32>
    %131 = arith.cmpf oeq, %127, %130 : vector<32x128xf32>
    %c-1_i32_40 = arith.constant -1 : i32
    %132 = vector.shape_cast %0 : vector<1x128xi32> to vector<1x128xi32>
    %133 = vector.broadcast %132 : vector<1x128xi32> to vector<32x128xi32>
    %134 = vector.broadcast %c-1_i32_40 : i32 to vector<32x128xi32>
    %135 = arith.select %131, %133, %134 : vector<32x128xi1>, vector<32x128xi32>
    %cst_41 = arith.constant dense<-2147483648> : vector<32xi32>
    %136 = vector.multi_reduction <maxsi>, %135, %cst_41 [1] : vector<32x128xi32> to vector<32xi32>
    %137 = vector.shape_cast %136 : vector<32xi32> to vector<32x1xi32>
    %138 = vector.broadcast %0 : vector<1x128xi32> to vector<32x128xi32>
    %139 = vector.broadcast %137 : vector<32x1xi32> to vector<32x128xi32>
    %140 = arith.cmpi eq, %138, %139 : vector<32x128xi32>
    %cst_42 = arith.constant 0xFF800000 : f32
    %141 = vector.broadcast %cst_42 : f32 to vector<32x128xf32>
    %142 = arith.select %140, %141, %127 : vector<32x128xi1>, vector<32x128xf32>
    %cst_43 = arith.constant dense<0xFF800000> : vector<32xf32>
    %143 = vector.multi_reduction <maximumf>, %142, %cst_43 [1] : vector<32x128xf32> to vector<32xf32>
    %144 = vector.shape_cast %143 : vector<32xf32> to vector<32x1xf32>
    %145 = vector.broadcast %144 : vector<32x1xf32> to vector<32x128xf32>
    %146 = arith.cmpf oeq, %142, %145 : vector<32x128xf32>
    %c-1_i32_44 = arith.constant -1 : i32
    %147 = vector.shape_cast %0 : vector<1x128xi32> to vector<1x128xi32>
    %148 = vector.broadcast %147 : vector<1x128xi32> to vector<32x128xi32>
    %149 = vector.broadcast %c-1_i32_44 : i32 to vector<32x128xi32>
    %150 = arith.select %146, %148, %149 : vector<32x128xi1>, vector<32x128xi32>
    %cst_45 = arith.constant dense<-2147483648> : vector<32xi32>
    %151 = vector.multi_reduction <maxsi>, %150, %cst_45 [1] : vector<32x128xi32> to vector<32xi32>
    %152 = vector.shape_cast %151 : vector<32xi32> to vector<32x1xi32>
    %153 = vector.broadcast %0 : vector<1x128xi32> to vector<32x128xi32>
    %154 = vector.broadcast %152 : vector<32x1xi32> to vector<32x128xi32>
    %155 = arith.cmpi eq, %153, %154 : vector<32x128xi32>
    %cst_46 = arith.constant 0xFF800000 : f32
    %156 = vector.broadcast %cst_46 : f32 to vector<32x128xf32>
    %157 = arith.select %155, %156, %142 : vector<32x128xi1>, vector<32x128xf32>
    %cst_47 = arith.constant dense<0xFF800000> : vector<32xf32>
    %158 = vector.multi_reduction <maximumf>, %157, %cst_47 [1] : vector<32x128xf32> to vector<32xf32>
    %159 = vector.shape_cast %158 : vector<32xf32> to vector<32x1xf32>
    %160 = vector.broadcast %159 : vector<32x1xf32> to vector<32x128xf32>
    %161 = arith.cmpf oeq, %157, %160 : vector<32x128xf32>
    %c-1_i32_48 = arith.constant -1 : i32
    %162 = vector.shape_cast %0 : vector<1x128xi32> to vector<1x128xi32>
    %163 = vector.broadcast %162 : vector<1x128xi32> to vector<32x128xi32>
    %164 = vector.broadcast %c-1_i32_48 : i32 to vector<32x128xi32>
    %165 = arith.select %161, %163, %164 : vector<32x128xi1>, vector<32x128xi32>
    %cst_49 = arith.constant dense<-2147483648> : vector<32xi32>
    %166 = vector.multi_reduction <maxsi>, %165, %cst_49 [1] : vector<32x128xi32> to vector<32xi32>
    %167 = vector.shape_cast %166 : vector<32xi32> to vector<32x1xi32>
    %168 = vector.broadcast %0 : vector<1x128xi32> to vector<32x128xi32>
    %169 = vector.broadcast %167 : vector<32x1xi32> to vector<32x128xi32>
    %170 = arith.cmpi eq, %168, %169 : vector<32x128xi32>
    %cst_50 = arith.constant 0xFF800000 : f32
    %171 = vector.broadcast %cst_50 : f32 to vector<32x128xf32>
    %172 = arith.select %170, %171, %157 : vector<32x128xi1>, vector<32x128xf32>
    %cst_51 = arith.constant dense<0xFF800000> : vector<32xf32>
    %173 = vector.multi_reduction <maximumf>, %172, %cst_51 [1] : vector<32x128xf32> to vector<32xf32>
    %174 = vector.shape_cast %173 : vector<32xf32> to vector<32x1xf32>
    %175 = vector.broadcast %174 : vector<32x1xf32> to vector<32x128xf32>
    %176 = arith.cmpf oeq, %172, %175 : vector<32x128xf32>
    %c-1_i32_52 = arith.constant -1 : i32
    %177 = vector.shape_cast %0 : vector<1x128xi32> to vector<1x128xi32>
    %178 = vector.broadcast %177 : vector<1x128xi32> to vector<32x128xi32>
    %179 = vector.broadcast %c-1_i32_52 : i32 to vector<32x128xi32>
    %180 = arith.select %176, %178, %179 : vector<32x128xi1>, vector<32x128xi32>
    %cst_53 = arith.constant dense<-2147483648> : vector<32xi32>
    %181 = vector.multi_reduction <maxsi>, %180, %cst_53 [1] : vector<32x128xi32> to vector<32xi32>
    %182 = vector.shape_cast %181 : vector<32xi32> to vector<32x1xi32>
    %183 = vector.broadcast %0 : vector<1x128xi32> to vector<32x128xi32>
    %184 = vector.broadcast %182 : vector<32x1xi32> to vector<32x128xi32>
    %185 = arith.cmpi eq, %183, %184 : vector<32x128xi32>
    %cst_54 = arith.constant 0xFF800000 : f32
    %186 = vector.broadcast %cst_54 : f32 to vector<32x128xf32>
    %187 = arith.select %185, %186, %172 : vector<32x128xi1>, vector<32x128xf32>
    %188 = vector.broadcast %109 : vector<32x1xf32> to vector<32x128xf32>
    %189 = arith.subf %187, %188 : vector<32x128xf32>
    %cst_55 = arith.constant 8.000000e+01 : f32
    %190 = vector.broadcast %cst_55 : f32 to vector<32x128xf32>
    %191 = arith.minimumf %189, %190 : vector<32x128xf32>
    %cst_56 = arith.constant 0xFF800000 : f32
    %192 = vector.broadcast %cst_56 : f32 to vector<32x128xf32>
    %193 = arith.select %112, %192, %191 : vector<32x128xi1>, vector<32x128xf32>
    %194 = math.exp %193 : vector<32x128xf32>
    %cst_57 = arith.constant dense<0.000000e+00> : vector<32xf32>
    %195 = vector.multi_reduction <add>, %194, %cst_57 [1] : vector<32x128xf32> to vector<32xf32>
    %196 = vector.shape_cast %195 : vector<32xf32> to vector<32x1xf32>
    %cst_58 = arith.constant 1.000000e+00 : f32
    %197 = vector.broadcast %cst_58 : f32 to vector<32x1xf32>
    %198 = arith.addf %197, %196 : vector<32x1xf32>
    %199 = math.log %198 : vector<32x1xf32>
    %c32_i32 = arith.constant 32 : i32
    %200 = arith.addi %1, %c32_i32 : i32
    %201 = tpu.iota {dimensions = array<i32: 0>} : vector<32x1xi32>
    %202 = vector.broadcast %200 : i32 to vector<32x1xi32>
    %203 = arith.addi %202, %201 : vector<32x1xi32>
    %c100_i32_59 = arith.constant 100 : i32
    %204 = vector.broadcast %c100_i32_59 : i32 to vector<32x1xi32>
    %205 = arith.cmpi slt, %203, %204 : vector<32x1xi32>
    %cst_60 = arith.constant 0.000000e+00 : f32
    %206 = vector.broadcast %cst_60 : f32 to vector<32x1xf32>
    %207 = arith.select %205, %199, %206 : vector<32x1xi1>, vector<32x1xf32>
    %cst_61 = arith.constant dense<0.000000e+00> : vector<1xf32>
    %208 = vector.multi_reduction <add>, %207, %cst_61 [0] : vector<32x1xf32> to vector<1xf32>
    %209 = vector.shape_cast %208 : vector<1xf32> to vector<1x1xf32>
    %210 = arith.addf %106, %209 : vector<1x1xf32>
    %211 = tpu.iota {dimensions = array<i32: 0>} : vector<8x128xi32>
    %212 = tpu.iota {dimensions = array<i32: 1>} : vector<8x128xi32>
    %c0_i32_62 = arith.constant 0 : i32
    %213 = vector.broadcast %c0_i32_62 : i32 to vector<8x128xi32>
    %214 = arith.cmpi eq, %211, %213 : vector<8x128xi32>
    %c0_i32_63 = arith.constant 0 : i32
    %215 = vector.broadcast %c0_i32_63 : i32 to vector<8x128xi32>
    %216 = arith.cmpi eq, %212, %215 : vector<8x128xi32>
    %217 = arith.andi %214, %216 : vector<8x128xi1>
    %218 = vector.shape_cast %210 : vector<1x1xf32> to vector<1x1xf32>
    %219 = vector.broadcast %218 : vector<1x1xf32> to vector<8x128xf32>
    %cst_64 = arith.constant 0.000000e+00 : f32
    %220 = vector.broadcast %cst_64 : f32 to vector<8x128xf32>
    %221 = arith.select %217, %219, %220 : vector<8x128xi1>, vector<8x128xf32>
    %c0_65 = arith.constant 0 : index
    %c0_66 = arith.constant 0 : index
    %222 = vector.load %arg4[%c0_65, %c0_66] : memref<8x128xf32, #tpu.memory_space<vmem>>, vector<8x128xf32>
    tpu.vector_store %arg4[%c0_65, %c0_66], %221 {strides = array<i32>} : memref<8x128xf32, #tpu.memory_space<vmem>>, vector<8x128xf32>,
    return
  }
  func.func @transform_0(%arg0: i32) -> (i32, i32) {
    %c0_i32 = arith.constant 0 : i32
    %c0_i32_0 = arith.constant 0 : i32
    return %arg0, %c0_i32 : i32, i32
  }
  func.func @transform_1(%arg0: i32) -> (i32, i32) {
    %c0_i32 = arith.constant 0 : i32
    %c0_i32_0 = arith.constant 0 : i32
    return %arg0, %c0_i32 : i32, i32
  }
  func.func @transform_2(%arg0: i32) -> (i32, i32) {
    %c0_i32 = arith.constant 0 : i32
    %c0_i32_0 = arith.constant 0 : i32
    return %arg0, %c0_i32 : i32, i32
  }
  func.func @transform_3(%arg0: i32) -> (i32, i32) {
    %c0_i32 = arith.constant 0 : i32
    %c0_i32_0 = arith.constant 0 : i32
    return %arg0, %c0_i32 : i32, i32
  }
}

</mosaic_0001>

<llo_original>
// kernel: tpu_custom_call.1
$region0: #{tpu_custom_call.1}
  #allocation0 [shape = 'u32[]', space=smem, size = 0x4, offset = 0x4, fixed_abs, tag = 'smem constant byte address 0x4 - core index']
  #allocation1 [shape = 'u32[144,128]{1,0:T(1,128)}', space=vmem, size = 0x12000, scoped, tag = 'internal scratch']
  %s0 = inlined_call_operand.vmem [shape: f32[128,128], index: 0, kind: input, shape index: {}]
  %s1 = inlined_call_operand.vmem [shape: s32[128,1], index: 1, kind: input, shape index: {}]
  %s2 = inlined_call_operand.vmem [shape: f32[128,1], index: 2, kind: input, shape index: {}]
  %s3 = inlined_call_operand.hbm [shape: f32[16,128], index: 3, kind: output, shape index: {}]
  %s4 = sld [smem:[#allocation0]]
  $region45: #{tpu_custom_call.1} parent=0
    _
  %s6 = ssub.s32 1, %s4
  %s7 = scalar_select 0, %s6, %s4
  $region1: #{tpu_custom_call.1} parent=0
    #allocation2 [shape = 'u8[8192]{0}', space=vmem, size = 0x2000, scoped, tag = 'output window, operand 0']
    #allocation3 [shape = 's32[2]{0}', space=sflag, size = 0x8, scoped, tag = 'scoped memory for tpu_custom_call.1']
    %8 = vsyncpa [#allocation3], 0
    %s9 = scalar_lea.sflag [#allocation3], 1
    %10 = vsyncpa %s9, 0
    loop: start=0, step=1, limit=4
    $region2: #{tpu_custom_call.1} parent=1 // loop_pre_header
      _
    $region3: #{tpu_custom_call.1} parent=1 // loop_header
      %s12 = sphi 0, %s16
      %p13 = scmp.ge.s32.totalorder %s12, 4
      %s22 = sphi 0, %s24
      %s25 = sphi 0, %s22
      %s26 = sphi 0, %s25
      %s42 = sphi 0, %s26
      %s48 = sphi 0, %s50
      %s51 = sphi 0, %s48
      %s52 = sphi 0, %s51
      %s68 = sphi 0, %s52
      %s74 = sphi 0, %s76
      %s77 = sphi 0, %s74
      %s78 = sphi 0, %s77
      %s94 = sphi 0, %s78
      %s100 = sphi 0, %s102
      %s103 = sphi 0, %s100
      %s104 = sphi 0, %s103
      %s120 = sphi 0, %s104
    $region4: #{tpu_custom_call.1} parent=1 // loop_header_branch
      %15 = sbr.rel (%p13) target = $region8
    $region5: #{tpu_custom_call.1} parent=1 // loop_body
      %s17 = ssub.s32 %s12, 1
      %s18 = ssub.s32 %s12, 2
      %s19 = sadd.s32 %s12, 1
      %s20 = ssub.s32 %s12, %s19
      %p21 = scmp.eq.s32.totalorder %s20, 0
      %s23 = sadd.s32 %s22, 1
      %s24 = scalar_select %p21, %s22, %s23
      %p27 = pneg %p21
      %p28 = scmp.eq.s32.totalorder %s12, 1
      %p29 = por %p27, %p28
      %p30 = scmp.ne.s32.totalorder %s22, %s25
      %p31 = scmp.eq.s32.totalorder %s12, 0
      %p32 = por %p30, %p31
      %p33 = scmp.ne.s32.totalorder %s22, %s25
      %p34 = scmp.eq.s32.totalorder %s17, 1
      %p35 = por %p33, %p34
      %p36 = scmp.ne.s32.totalorder %s25, %s26
      %p37 = scmp.eq.s32.totalorder %s17, 0
      %p38 = por %p36, %p37
      %p39 = scmp.ne.s32.totalorder %s25, %s26
      %p40 = scmp.eq.s32.totalorder %s18, 1
      %p41 = por %p39, %p40
      %p43 = scmp.ne.s32.totalorder %s26, %s42
      %p44 = scmp.eq.s32.totalorder %s18, 0
      %p45 = por %p43, %p44
      %s46 = ssub.s32 %s12, %s19
      %p47 = scmp.eq.s32.totalorder %s46, 0
      %s49 = sadd.s32 %s48, 1
      %s50 = scalar_select %p47, %s48, %s49
      %p53 = pneg %p47
      %p54 = scmp.eq.s32.totalorder %s12, 1
      %p55 = por %p53, %p54
      %p56 = scmp.ne.s32.totalorder %s48, %s51
      %p57 = scmp.eq.s32.totalorder %s12, 0
      %p58 = por %p56, %p57
      %p59 = scmp.ne.s32.totalorder %s48, %s51
      %p60 = scmp.eq.s32.totalorder %s17, 1
      %p61 = por %p59, %p60
      %p62 = scmp.ne.s32.totalorder %s51, %s52
      %p63 = scmp.eq.s32.totalorder %s17, 0
      %p64 = por %p62, %p63
      %p65 = scmp.ne.s32.totalorder %s51, %s52
      %p66 = scmp.eq.s32.totalorder %s18, 1
      %p67 = por %p65, %p66
      %p69 = scmp.ne.s32.totalorder %s52, %s68
      %p70 = scmp.eq.s32.totalorder %s18, 0
      %p71 = por %p69, %p70
      %s72 = ssub.s32 %s12, %s19
      %p73 = scmp.eq.s32.totalorder %s72, 0
      %s75 = sadd.s32 %s74, 1
      %s76 = scalar_select %p73, %s74, %s75
      %p79 = pneg %p73
      %p80 = scmp.eq.s32.totalorder %s12, 1
      %p81 = por %p79, %p80
      %p82 = scmp.ne.s32.totalorder %s74, %s77
      %p83 = scmp.eq.s32.totalorder %s12, 0
      %p84 = por %p82, %p83
      %p85 = scmp.ne.s32.totalorder %s74, %s77
      %p86 = scmp.eq.s32.totalorder %s17, 1
      %p87 = por %p85, %p86
      %p88 = scmp.ne.s32.totalorder %s77, %s78
      %p89 = scmp.eq.s32.totalorder %s17, 0
      %p90 = por %p88, %p89
      %p91 = scmp.ne.s32.totalorder %s77, %s78
      %p92 = scmp.eq.s32.totalorder %s18, 1
      %p93 = por %p91, %p92
      %p95 = scmp.ne.s32.totalorder %s78, %s94
      %p96 = scmp.eq.s32.totalorder %s18, 0
      %p97 = por %p95, %p96
      %s98 = ssub.s32 %s12, %s19
      %p99 = scmp.eq.s32.totalorder %s98, 0
      %s101 = sadd.s32 %s100, 1
      %s102 = scalar_select %p99, %s100, %s101
      %p105 = pneg %p99
      %p106 = scmp.eq.s32.totalorder %s12, 1
      %p107 = por %p105, %p106
      %p108 = scmp.ne.s32.totalorder %s100, %s103
      %p109 = scmp.eq.s32.totalorder %s12, 0
      %p110 = por %p108, %p109
      %p111 = scmp.ne.s32.totalorder %s100, %s103
      %p112 = scmp.eq.s32.totalorder %s17, 1
      %p113 = por %p111, %p112
      %p114 = scmp.ne.s32.totalorder %s103, %s104
      %p115 = scmp.eq.s32.totalorder %s17, 0
      %p116 = por %p114, %p115
      %p117 = scmp.ne.s32.totalorder %s103, %s104
      %p118 = scmp.eq.s32.totalorder %s18, 1
      %p119 = por %p117, %p118
      %p121 = scmp.ne.s32.totalorder %s104, %s120
      %p122 = scmp.eq.s32.totalorder %s18, 0
      %p123 = por %p121, %p122
      %p124 = scmp.le.s32.totalorder 1, %s12
      %p125 = scmp.lt.s32.totalorder %s12, 3
      %p126 = pnand %p124, %p125
      %p127 = pneg %p126
      // Predicated region
      $region9: #{tpu_custom_call.1} parent=5 // pred_check
        _
      $region10: #{tpu_custom_call.1} parent=5 // pred_check_branch
        %129 = sbr.rel (%p126) target = $region12
      $region11: #{tpu_custom_call.1} parent=5 // pred_region
        %s130 = ssub.s32 %s12, 1
      $region12: #{tpu_custom_call.1} parent=5 // pred_fallthru
        _
      %p131 = scmp.lt.s32.totalorder %s12, 2
      // Predicated region
      $region13: #{tpu_custom_call.1} parent=5 // pred_check
        %p132 = pneg %p131
      $region14: #{tpu_custom_call.1} parent=5 // pred_check_branch
        %134 = sbr.rel (%p132) target = $region16
      $region15: #{tpu_custom_call.1} parent=5 // pred_region
        // Predicated region
        $region17: #{tpu_custom_call.1} parent=15 // pred_check
          %p135 = pneg %p32
        $region18: #{tpu_custom_call.1} parent=15 // pred_check_branch
          %137 = sbr.rel (%p135) target = $region20
        $region19: #{tpu_custom_call.1} parent=15 // pred_region
          %s138 = smul.u32 8, %s12
          %p139 = scmp.lt.s32.totalorder %s138, 15
          %s140 = scalar_select %p139, %s138, 15
          %s141 = smul.addr %s140, 8
          %s142 = scalar_lea.vmem %s0, %s141
          %s143 = smul.u32 8, %s12
        $region20: #{tpu_custom_call.1} parent=15 // pred_fallthru
          _
        // Predicated region
        $region21: #{tpu_custom_call.1} parent=15 // pred_check
          %p144 = pneg %p58
        $region22: #{tpu_custom_call.1} parent=15 // pred_check_branch
          %146 = sbr.rel (%p144) target = $region24
        $region23: #{tpu_custom_call.1} parent=15 // pred_region
          %s147 = smul.u32 8, %s12
          %p148 = scmp.lt.s32.totalorder %s147, 15
          %s149 = scalar_select %p148, %s147, 15
          %s150 = smul.addr %s149, 8
          %s151 = scalar_lea.vmem %s1, %s150
          %s152 = smul.u32 8, %s12
        $region24: #{tpu_custom_call.1} parent=15 // pred_fallthru
          _
        // Predicated region
        $region25: #{tpu_custom_call.1} parent=15 // pred_check
          %p153 = pneg %p84
        $region26: #{tpu_custom_call.1} parent=15 // pred_check_branch
          %155 = sbr.rel (%p153) target = $region28
        $region27: #{tpu_custom_call.1} parent=15 // pred_region
          %s156 = smul.u32 8, %s12
          %p157 = scmp.lt.s32.totalorder %s156, 15
          %s158 = scalar_select %p157, %s156, 15
          %s159 = smul.addr %s158, 8
          %s160 = scalar_lea.vmem %s2, %s159
          %s161 = smul.u32 8, %s12
        $region28: #{tpu_custom_call.1} parent=15 // pred_fallthru
          _
      $region16: #{tpu_custom_call.1} parent=5 // pred_fallthru
        _
      %p162 = scmp.le.s32.totalorder 1, %s12
      %p163 = scmp.lt.s32.totalorder %s12, 3
      %p164 = pnand %p162, %p163
      %p165 = pneg %p164
      // Predicated region
      $region29: #{tpu_custom_call.1} parent=5 // pred_check
        _
      $region30: #{tpu_custom_call.1} parent=5 // pred_check_branch
        %167 = sbr.rel (%p164) target = $region32
      $region31: #{tpu_custom_call.1} parent=5 // pred_region
        %s168 = ssub.s32 %s12, 1
        %s169 = smul.u32 8, %s17
        %p170 = scmp.lt.s32.totalorder %s169, 15
        %s171 = scalar_select %p170, %s169, 15
        %s172 = smul.addr %s171, 8
        %s173 = scalar_lea.vmem %s0, %s172
        %p174 = pneg %p38
        %p175 = pneg %p35
        %s176 = smul.u32 8, %s17
        %p177 = scmp.lt.s32.totalorder %s176, 15
        %s178 = scalar_select %p177, %s176, 15
        %s179 = smul.addr %s178, 8
        %s180 = scalar_lea.vmem %s1, %s179
        %p181 = pneg %p64
        %p182 = pneg %p61
        %s183 = smul.u32 8, %s17
        %p184 = scmp.lt.s32.totalorder %s183, 15
        %s185 = scalar_select %p184, %s183, 15
        %s186 = smul.addr %s185, 8
        %s187 = scalar_lea.vmem %s2, %s186
        %p188 = pneg %p90
        %p189 = pneg %p87
        %p190 = pneg %p116
        %p191 = pneg %p113
        %s192 = sand.u32 %s103, 1
        %s193 = scalar_lea.sflag [#allocation3], %s192
        %s194 = sand.u32 %s103, 1
        %s195 = smul.addr %s194, 8
        %s196 = scalar_lea.vmem [#allocation2], %s195
        %s197 = smul.u32 8, %s17
        %p198 = scmp.lt.s32.totalorder %s197, 15
        %s199 = scalar_select %p198, %s197, 15
        %s200 = smul.addr %s199, 8
        %s201 = scalar_lea.vmem %s0, %s200
        %s202 = smul.u32 8, %s17
        %s203 = smul.u32 8, %s17
        %p204 = scmp.lt.s32.totalorder %s203, 15
        %s205 = scalar_select %p204, %s203, 15
        %s206 = smul.addr %s205, 8
        %s207 = scalar_lea.vmem %s1, %s206
        %s208 = smul.u32 8, %s17
        %s209 = smul.u32 8, %s17
        %p210 = scmp.lt.s32.totalorder %s209, 15
        %s211 = scalar_select %p210, %s209, 15
        %s212 = smul.addr %s211, 8
        %s213 = scalar_lea.vmem %s2, %s212
        %s214 = smul.u32 8, %s17
        %v215 = vlaneseq
        %v216 = vand.u32 %v215, 127
        %s217 = smul.u32 %s17, 64
        %v218 = vld [vmem:[%s201] sm:$0xff]
        %v219 = vld [vmem:[%s201 + $0x8] sm:$0xff]
        %v220 = vld [vmem:[%s201 + $0x10] sm:$0xff]
        %v221 = vld [vmem:[%s201 + $0x18] sm:$0xff]
        %v222 = vld [vmem:[%s207] sm:$0xff]
        %v223 = vld [vmem:[%s207 + $0x8] sm:$0xff]
        %v224 = vld [vmem:[%s207 + $0x10] sm:$0xff]
        %v225 = vld [vmem:[%s207 + $0x18] sm:$0xff]
        %v226 = vld [vmem:[%s213] sm:$0xff]
        %v227 = vld [vmem:[%s213 + $0x8] sm:$0xff]
        %v228 = vld [vmem:[%s213 + $0x10] sm:$0xff]
        %v229 = vld [vmem:[%s213 + $0x18] sm:$0xff]
        %230 = vset.pattern.permute.xlu0 0
        %231 = vperm.xlu0 %230, %v222
        %v232 = vpop.permute.xlu0 %231
        %233 = vset.pattern.permute.xlu0 0
        %234 = vperm.xlu0 %233, %v223
        %v235 = vpop.permute.xlu0 %234
        %236 = vset.pattern.permute.xlu0 0
        %237 = vperm.xlu0 %236, %v224
        %v238 = vpop.permute.xlu0 %237
        %239 = vset.pattern.permute.xlu0 0
        %240 = vperm.xlu0 %239, %v225
        %v241 = vpop.permute.xlu0 %240
        %vm242 = vcmp.eq.s32.totalorder %v216, %v232
        %vm243 = vcmp.eq.s32.totalorder %v216, %v235
        %vm244 = vcmp.eq.s32.totalorder %v216, %v238
        %vm245 = vcmp.eq.s32.totalorder %v216, %v241
        %246 = vmax.xlane.f32.xlu0 %v218
        %v247 = vpop.xlane.xlu0 %246
        %248 = vmax.xlane.f32.xlu0 %v219
        %v249 = vpop.xlane.xlu0 %248
        %250 = vmax.xlane.f32.xlu0 %v220
        %v251 = vpop.xlane.xlu0 %250
        %252 = vmax.xlane.f32.xlu0 %v221
        %v253 = vpop.xlane.xlu0 %252
        %vm254 = vcmp.eq.f32.partialorder %v218, %v247
        %vm255 = vcmp.eq.f32.partialorder %v219, %v249
        %vm256 = vcmp.eq.f32.partialorder %v220, %v251
        %vm257 = vcmp.eq.f32.partialorder %v221, %v253
        %v258 = vsel %vm254, %v216, 4294967295
        %v259 = vsel %vm255, %v216, 4294967295
        %v260 = vsel %vm256, %v216, 4294967295
        %v261 = vsel %vm257, %v216, 4294967295
        %v262 = vand.u32 %v258, 65535
        %v263 = vshra.s32 %v258, 16
        %v264 = vcvt.s32.f32 %v262
        %v265 = vcvt.s32.f32 %v263
        %266 = vmax.xlane.f32.xlu0 %v265
        %v267 = vpop.xlane.xlu0 %266
        %vm268 = vcmp.eq.f32.partialorder %v265, %v267
        %v269 = vsel %vm268, %v264, -inf
        %270 = vmax.xlane.f32.xlu0 %v269
        %v271 = vpop.xlane.xlu0 %270
        %v272 = vcvt.f32.s32 %v271
        %v273 = vcvt.f32.s32 %v267
        %v274 = vshll.u32 %v273, 16
        %v275 = vadd.s32 %v274, %v272
        %v276 = vand.u32 %v259, 65535
        %v277 = vshra.s32 %v259, 16
        %v278 = vcvt.s32.f32 %v276
        %v279 = vcvt.s32.f32 %v277
        %280 = vmax.xlane.f32.xlu0 %v279
        %v281 = vpop.xlane.xlu0 %280
        %vm282 = vcmp.eq.f32.partialorder %v279, %v281
        %v283 = vsel %vm282, %v278, -inf
        %284 = vmax.xlane.f32.xlu0 %v283
        %v285 = vpop.xlane.xlu0 %284
        %v286 = vcvt.f32.s32 %v285
        %v287 = vcvt.f32.s32 %v281
        %v288 = vshll.u32 %v287, 16
        %v289 = vadd.s32 %v288, %v286
        %v290 = vand.u32 %v260, 65535
        %v291 = vshra.s32 %v260, 16
        %v292 = vcvt.s32.f32 %v290
        %v293 = vcvt.s32.f32 %v291
        %294 = vmax.xlane.f32.xlu0 %v293
        %v295 = vpop.xlane.xlu0 %294
        %vm296 = vcmp.eq.f32.partialorder %v293, %v295
        %v297 = vsel %vm296, %v292, -inf
        %298 = vmax.xlane.f32.xlu0 %v297
        %v299 = vpop.xlane.xlu0 %298
        %v300 = vcvt.f32.s32 %v299
        %v301 = vcvt.f32.s32 %v295
        %v302 = vshll.u32 %v301, 16
        %v303 = vadd.s32 %v302, %v300
        %v304 = vand.u32 %v261, 65535
        %v305 = vshra.s32 %v261, 16
        %v306 = vcvt.s32.f32 %v304
        %v307 = vcvt.s32.f32 %v305
        %308 = vmax.xlane.f32.xlu0 %v307
        %v309 = vpop.xlane.xlu0 %308
        %vm310 = vcmp.eq.f32.partialorder %v307, %v309
        %v311 = vsel %vm310, %v306, -inf
        %312 = vmax.xlane.f32.xlu0 %v311
        %v313 = vpop.xlane.xlu0 %312
        %v314 = vcvt.f32.s32 %v313
        %v315 = vcvt.f32.s32 %v309
        %v316 = vshll.u32 %v315, 16
        %v317 = vadd.s32 %v316, %v314
        %vm318 = vcmp.eq.s32.totalorder %v216, %v275
        %vm319 = vcmp.eq.s32.totalorder %v216, %v289
        %vm320 = vcmp.eq.s32.totalorder %v216, %v303
        %vm321 = vcmp.eq.s32.totalorder %v216, %v317
        %v322 = vsel %vm318, -inf, %v218
        %v323 = vsel %vm319, -inf, %v219
        %v324 = vsel %vm320, -inf, %v220
        %v325 = vsel %vm321, -inf, %v221
        %326 = vmax.xlane.f32.xlu0 %v322
        %v327 = vpop.xlane.xlu0 %326
        %328 = vmax.xlane.f32.xlu0 %v323
        %v329 = vpop.xlane.xlu0 %328
        %330 = vmax.xlane.f32.xlu0 %v324
        %v331 = vpop.xlane.xlu0 %330
        %332 = vmax.xlane.f32.xlu0 %v325
        %v333 = vpop.xlane.xlu0 %332
        %vm334 = vcmp.eq.f32.partialorder %v322, %v327
        %vm335 = vcmp.eq.f32.partialorder %v323, %v329
        %vm336 = vcmp.eq.f32.partialorder %v324, %v331
        %vm337 = vcmp.eq.f32.partialorder %v325, %v333
        %v338 = vsel %vm334, %v216, 4294967295
        %v339 = vsel %vm335, %v216, 4294967295
        %v340 = vsel %vm336, %v216, 4294967295
        %v341 = vsel %vm337, %v216, 4294967295
        %v342 = vand.u32 %v338, 65535
        %v343 = vshra.s32 %v338, 16
        %v344 = vcvt.s32.f32 %v342
        %v345 = vcvt.s32.f32 %v343
        %346 = vmax.xlane.f32.xlu0 %v345
        %v347 = vpop.xlane.xlu0 %346
        %vm348 = vcmp.eq.f32.partialorder %v345, %v347
        %v349 = vsel %vm348, %v344, -inf
        %350 = vmax.xlane.f32.xlu0 %v349
        %v351 = vpop.xlane.xlu0 %350
        %v352 = vcvt.f32.s32 %v351
        %v353 = vcvt.f32.s32 %v347
        %v354 = vshll.u32 %v353, 16
        %v355 = vadd.s32 %v354, %v352
        %v356 = vand.u32 %v339, 65535
        %v357 = vshra.s32 %v339, 16
        %v358 = vcvt.s32.f32 %v356
        %v359 = vcvt.s32.f32 %v357
        %360 = vmax.xlane.f32.xlu0 %v359
        %v361 = vpop.xlane.xlu0 %360
        %vm362 = vcmp.eq.f32.partialorder %v359, %v361
        %v363 = vsel %vm362, %v358, -inf
        %364 = vmax.xlane.f32.xlu0 %v363
        %v365 = vpop.xlane.xlu0 %364
        %v366 = vcvt.f32.s32 %v365
        %v367 = vcvt.f32.s32 %v361
        %v368 = vshll.u32 %v367, 16
        %v369 = vadd.s32 %v368, %v366
        %v370 = vand.u32 %v340, 65535
        %v371 = vshra.s32 %v340, 16
        %v372 = vcvt.s32.f32 %v370
        %v373 = vcvt.s32.f32 %v371
        %374 = vmax.xlane.f32.xlu0 %v373
        %v375 = vpop.xlane.xlu0 %374
        %vm376 = vcmp.eq.f32.partialorder %v373, %v375
        %v377 = vsel %vm376, %v372, -inf
        %378 = vmax.xlane.f32.xlu0 %v377
        %v379 = vpop.xlane.xlu0 %378
        %v380 = vcvt.f32.s32 %v379
        %v381 = vcvt.f32.s32 %v375
        %v382 = vshll.u32 %v381, 16
        %v383 = vadd.s32 %v382, %v380
        %v384 = vand.u32 %v341, 65535
        %v385 = vshra.s32 %v341, 16
        %v386 = vcvt.s32.f32 %v384
        %v387 = vcvt.s32.f32 %v385
        %388 = vmax.xlane.f32.xlu0 %v387
        %v389 = vpop.xlane.xlu0 %388
        %vm390 = vcmp.eq.f32.partialorder %v387, %v389
        %v391 = vsel %vm390, %v386, -inf
        %392 = vmax.xlane.f32.xlu0 %v391
        %v393 = vpop.xlane.xlu0 %392
        %v394 = vcvt.f32.s32 %v393
        %v395 = vcvt.f32.s32 %v389
        %v396 = vshll.u32 %v395, 16
        %v397 = vadd.s32 %v396, %v394
        %vm398 = vcmp.eq.s32.totalorder %v216, %v355
        %vm399 = vcmp.eq.s32.totalorder %v216, %v369
        %vm400 = vcmp.eq.s32.totalorder %v216, %v383
        %vm401 = vcmp.eq.s32.totalorder %v216, %v397
        %v402 = vsel %vm398, -inf, %v322
        %v403 = vsel %vm399, -inf, %v323
        %v404 = vsel %vm400, -inf, %v324
        %v405 = vsel %vm401, -inf, %v325
        %406 = vmax.xlane.f32.xlu0 %v402
        %v407 = vpop.xlane.xlu0 %406
        %408 = vmax.xlane.f32.xlu0 %v403
        %v409 = vpop.xlane.xlu0 %408
        %410 = vmax.xlane.f32.xlu0 %v404
        %v411 = vpop.xlane.xlu0 %410
        %412 = vmax.xlane.f32.xlu0 %v405
        %v413 = vpop.xlane.xlu0 %412
        %vm414 = vcmp.eq.f32.partialorder %v402, %v407
        %vm415 = vcmp.eq.f32.partialorder %v403, %v409
        %vm416 = vcmp.eq.f32.partialorder %v404, %v411
        %vm417 = vcmp.eq.f32.partialorder %v405, %v413
        %v418 = vsel %vm414, %v216, 4294967295
        %v419 = vsel %vm415, %v216, 4294967295
        %v420 = vsel %vm416, %v216, 4294967295
        %v421 = vsel %vm417, %v216, 4294967295
        %v422 = vand.u32 %v418, 65535
        %v423 = vshra.s32 %v418, 16
        %v424 = vcvt.s32.f32 %v422
        %v425 = vcvt.s32.f32 %v423
        %426 = vmax.xlane.f32.xlu0 %v425
        %v427 = vpop.xlane.xlu0 %426
        %vm428 = vcmp.eq.f32.partialorder %v425, %v427
        %v429 = vsel %vm428, %v424, -inf
        %430 = vmax.xlane.f32.xlu0 %v429
        %v431 = vpop.xlane.xlu0 %430
        %v432 = vcvt.f32.s32 %v431
        %v433 = vcvt.f32.s32 %v427
        %v434 = vshll.u32 %v433, 16
        %v435 = vadd.s32 %v434, %v432
        %v436 = vand.u32 %v419, 65535
        %v437 = vshra.s32 %v419, 16
        %v438 = vcvt.s32.f32 %v436
        %v439 = vcvt.s32.f32 %v437
        %440 = vmax.xlane.f32.xlu0 %v439
        %v441 = vpop.xlane.xlu0 %440
        %vm442 = vcmp.eq.f32.partialorder %v439, %v441
        %v443 = vsel %vm442, %v438, -inf
        %444 = vmax.xlane.f32.xlu0 %v443
        %v445 = vpop.xlane.xlu0 %444
        %v446 = vcvt.f32.s32 %v445
        %v447 = vcvt.f32.s32 %v441
        %v448 = vshll.u32 %v447, 16
        %v449 = vadd.s32 %v448, %v446
        %v450 = vand.u32 %v420, 65535
        %v451 = vshra.s32 %v420, 16
        %v452 = vcvt.s32.f32 %v450
        %v453 = vcvt.s32.f32 %v451
        %454 = vmax.xlane.f32.xlu0 %v453
        %v455 = vpop.xlane.xlu0 %454
        %vm456 = vcmp.eq.f32.partialorder %v453, %v455
        %v457 = vsel %vm456, %v452, -inf
        %458 = vmax.xlane.f32.xlu0 %v457
        %v459 = vpop.xlane.xlu0 %458
        %v460 = vcvt.f32.s32 %v459
        %v461 = vcvt.f32.s32 %v455
        %v462 = vshll.u32 %v461, 16
        %v463 = vadd.s32 %v462, %v460
        %v464 = vand.u32 %v421, 65535
        %v465 = vshra.s32 %v421, 16
        %v466 = vcvt.s32.f32 %v464
        %v467 = vcvt.s32.f32 %v465
        %468 = vmax.xlane.f32.xlu0 %v467
        %v469 = vpop.xlane.xlu0 %468
        %vm470 = vcmp.eq.f32.partialorder %v467, %v469
        %v471 = vsel %vm470, %v466, -inf
        %472 = vmax.xlane.f32.xlu0 %v471
        %v473 = vpop.xlane.xlu0 %472
        %v474 = vcvt.f32.s32 %v473
        %v475 = vcvt.f32.s32 %v469
        %v476 = vshll.u32 %v475, 16
        %v477 = vadd.s32 %v476, %v474
        %vm478 = vcmp.eq.s32.totalorder %v216, %v435
        %vm479 = vcmp.eq.s32.totalorder %v216, %v449
        %vm480 = vcmp.eq.s32.totalorder %v216, %v463
        %vm481 = vcmp.eq.s32.totalorder %v216, %v477
        %v482 = vsel %vm478, -inf, %v402
        %v483 = vsel %vm479, -inf, %v403
        %v484 = vsel %vm480, -inf, %v404
        %v485 = vsel %vm481, -inf, %v405
        %486 = vmax.xlane.f32.xlu0 %v482
        %v487 = vpop.xlane.xlu0 %486
        %488 = vmax.xlane.f32.xlu0 %v483
        %v489 = vpop.xlane.xlu0 %488
        %490 = vmax.xlane.f32.xlu0 %v484
        %v491 = vpop.xlane.xlu0 %490
        %492 = vmax.xlane.f32.xlu0 %v485
        %v493 = vpop.xlane.xlu0 %492
        %vm494 = vcmp.eq.f32.partialorder %v482, %v487
        %vm495 = vcmp.eq.f32.partialorder %v483, %v489
        %vm496 = vcmp.eq.f32.partialorder %v484, %v491
        %vm497 = vcmp.eq.f32.partialorder %v485, %v493
        %v498 = vsel %vm494, %v216, 4294967295
        %v499 = vsel %vm495, %v216, 4294967295
        %v500 = vsel %vm496, %v216, 4294967295
        %v501 = vsel %vm497, %v216, 4294967295
        %v502 = vand.u32 %v498, 65535
        %v503 = vshra.s32 %v498, 16
        %v504 = vcvt.s32.f32 %v502
        %v505 = vcvt.s32.f32 %v503
        %506 = vmax.xlane.f32.xlu0 %v505
        %v507 = vpop.xlane.xlu0 %506
        %vm508 = vcmp.eq.f32.partialorder %v505, %v507
        %v509 = vsel %vm508, %v504, -inf
        %510 = vmax.xlane.f32.xlu0 %v509
        %v511 = vpop.xlane.xlu0 %510
        %v512 = vcvt.f32.s32 %v511
        %v513 = vcvt.f32.s32 %v507
        %v514 = vshll.u32 %v513, 16
        %v515 = vadd.s32 %v514, %v512
        %v516 = vand.u32 %v499, 65535
        %v517 = vshra.s32 %v499, 16
        %v518 = vcvt.s32.f32 %v516
        %v519 = vcvt.s32.f32 %v517
        %520 = vmax.xlane.f32.xlu0 %v519
        %v521 = vpop.xlane.xlu0 %520
        %vm522 = vcmp.eq.f32.partialorder %v519, %v521
        %v523 = vsel %vm522, %v518, -inf
        %524 = vmax.xlane.f32.xlu0 %v523
        %v525 = vpop.xlane.xlu0 %524
        %v526 = vcvt.f32.s32 %v525
        %v527 = vcvt.f32.s32 %v521
        %v528 = vshll.u32 %v527, 16
        %v529 = vadd.s32 %v528, %v526
        %v530 = vand.u32 %v500, 65535
        %v531 = vshra.s32 %v500, 16
        %v532 = vcvt.s32.f32 %v530
        %v533 = vcvt.s32.f32 %v531
        %534 = vmax.xlane.f32.xlu0 %v533
        %v535 = vpop.xlane.xlu0 %534
        %vm536 = vcmp.eq.f32.partialorder %v533, %v535
        %v537 = vsel %vm536, %v532, -inf
        %538 = vmax.xlane.f32.xlu0 %v537
        %v539 = vpop.xlane.xlu0 %538
        %v540 = vcvt.f32.s32 %v539
        %v541 = vcvt.f32.s32 %v535
        %v542 = vshll.u32 %v541, 16
        %v543 = vadd.s32 %v542, %v540
        %v544 = vand.u32 %v501, 65535
        %v545 = vshra.s32 %v501, 16
        %v546 = vcvt.s32.f32 %v544
        %v547 = vcvt.s32.f32 %v545
        %548 = vmax.xlane.f32.xlu0 %v547
        %v549 = vpop.xlane.xlu0 %548
        %vm550 = vcmp.eq.f32.partialorder %v547, %v549
        %v551 = vsel %vm550, %v546, -inf
        %552 = vmax.xlane.f32.xlu0 %v551
        %v553 = vpop.xlane.xlu0 %552
        %v554 = vcvt.f32.s32 %v553
        %v555 = vcvt.f32.s32 %v549
        %v556 = vshll.u32 %v555, 16
        %v557 = vadd.s32 %v556, %v554
        %vm558 = vcmp.eq.s32.totalorder %v216, %v515
        %vm559 = vcmp.eq.s32.totalorder %v216, %v529
        %vm560 = vcmp.eq.s32.totalorder %v216, %v543
        %vm561 = vcmp.eq.s32.totalorder %v216, %v557
        %v562 = vsel %vm558, -inf, %v482
        %v563 = vsel %vm559, -inf, %v483
        %v564 = vsel %vm560, -inf, %v484
        %v565 = vsel %vm561, -inf, %v485
        %566 = vmax.xlane.f32.xlu0 %v562
        %v567 = vpop.xlane.xlu0 %566
        %568 = vmax.xlane.f32.xlu0 %v563
        %v569 = vpop.xlane.xlu0 %568
        %570 = vmax.xlane.f32.xlu0 %v564
        %v571 = vpop.xlane.xlu0 %570
        %572 = vmax.xlane.f32.xlu0 %v565
        %v573 = vpop.xlane.xlu0 %572
        %vm574 = vcmp.eq.f32.partialorder %v562, %v567
        %vm575 = vcmp.eq.f32.partialorder %v563, %v569
        %vm576 = vcmp.eq.f32.partialorder %v564, %v571
        %vm577 = vcmp.eq.f32.partialorder %v565, %v573
        %v578 = vsel %vm574, %v216, 4294967295
        %v579 = vsel %vm575, %v216, 4294967295
        %v580 = vsel %vm576, %v216, 4294967295
        %v581 = vsel %vm577, %v216, 4294967295
        %v582 = vand.u32 %v578, 65535
        %v583 = vshra.s32 %v578, 16
        %v584 = vcvt.s32.f32 %v582
        %v585 = vcvt.s32.f32 %v583
        %586 = vmax.xlane.f32.xlu0 %v585
        %v587 = vpop.xlane.xlu0 %586
        %vm588 = vcmp.eq.f32.partialorder %v585, %v587
        %v589 = vsel %vm588, %v584, -inf
        %590 = vmax.xlane.f32.xlu0 %v589
        %v591 = vpop.xlane.xlu0 %590
        %v592 = vcvt.f32.s32 %v591
        %v593 = vcvt.f32.s32 %v587
        %v594 = vshll.u32 %v593, 16
        %v595 = vadd.s32 %v594, %v592
        %v596 = vand.u32 %v579, 65535
        %v597 = vshra.s32 %v579, 16
        %v598 = vcvt.s32.f32 %v596
        %v599 = vcvt.s32.f32 %v597
        %600 = vmax.xlane.f32.xlu0 %v599
        %v601 = vpop.xlane.xlu0 %600
        %vm602 = vcmp.eq.f32.partialorder %v599, %v601
        %v603 = vsel %vm602, %v598, -inf
        %604 = vmax.xlane.f32.xlu0 %v603
        %v605 = vpop.xlane.xlu0 %604
        %v606 = vcvt.f32.s32 %v605
        %v607 = vcvt.f32.s32 %v601
        %v608 = vshll.u32 %v607, 16
        %v609 = vadd.s32 %v608, %v606
        %v610 = vand.u32 %v580, 65535
        %v611 = vshra.s32 %v580, 16
        %v612 = vcvt.s32.f32 %v610
        %v613 = vcvt.s32.f32 %v611
        %614 = vmax.xlane.f32.xlu0 %v613
        %v615 = vpop.xlane.xlu0 %614
        %vm616 = vcmp.eq.f32.partialorder %v613, %v615
        %v617 = vsel %vm616, %v612, -inf
        %618 = vmax.xlane.f32.xlu0 %v617
        %v619 = vpop.xlane.xlu0 %618
        %v620 = vcvt.f32.s32 %v619
        %v621 = vcvt.f32.s32 %v615
        %v622 = vshll.u32 %v621, 16
        %v623 = vadd.s32 %v622, %v620
        %v624 = vand.u32 %v581, 65535
        %v625 = vshra.s32 %v581, 16
        %v626 = vcvt.s32.f32 %v624
        %v627 = vcvt.s32.f32 %v625
        %628 = vmax.xlane.f32.xlu0 %v627
        %v629 = vpop.xlane.xlu0 %628
        %vm630 = vcmp.eq.f32.partialorder %v627, %v629
        %v631 = vsel %vm630, %v626, -inf
        %632 = vmax.xlane.f32.xlu0 %v631
        %v633 = vpop.xlane.xlu0 %632
        %v634 = vcvt.f32.s32 %v633
        %v635 = vcvt.f32.s32 %v629
        %v636 = vshll.u32 %v635, 16
        %v637 = vadd.s32 %v636, %v634
        %vm638 = vcmp.eq.s32.totalorder %v216, %v595
        %vm639 = vcmp.eq.s32.totalorder %v216, %v609
        %vm640 = vcmp.eq.s32.totalorder %v216, %v623
        %vm641 = vcmp.eq.s32.totalorder %v216, %v637
        %v642 = vsel %vm638, -inf, %v562
        %v643 = vsel %vm639, -inf, %v563
        %v644 = vsel %vm640, -inf, %v564
        %v645 = vsel %vm641, -inf, %v565
        %647 = vset.pattern.permute.xlu0 0
        %648 = vperm.xlu0 %647, %v226
        %v649 = vpop.permute.xlu0 %648
        %652 = vset.pattern.permute.xlu0 0
        %653 = vperm.xlu0 %652, %v227
        %v654 = vpop.permute.xlu0 %653
        %657 = vset.pattern.permute.xlu0 0
        %658 = vperm.xlu0 %657, %v228
        %v659 = vpop.permute.xlu0 %658
        %662 = vset.pattern.permute.xlu0 0
        %663 = vperm.xlu0 %662, %v229
        %v664 = vpop.permute.xlu0 %663
        %v666 = vsub.f32 %v642, %v649
        %v667 = vsub.f32 %v643, %v654
        %v668 = vsub.f32 %v644, %v659
        %v669 = vsub.f32 %v645, %v664
        %v670 = vmin.f32 %v666, 80.0
        %v671 = vmin.f32 %v667, 80.0
        %v672 = vmin.f32 %v668, 80.0
        %v673 = vmin.f32 %v669, 80.0
        %v674 = vsel %vm242, -inf, %v670
        %v675 = vsel %vm243, -inf, %v671
        %v676 = vsel %vm244, -inf, %v672
        %v677 = vsel %vm245, -inf, %v673
        %v678 = vmul.f32 %v674, 1.442695
        %v679 = vpow.pop %v678
        %v680 = vmul.f32 %v675, 1.442695
        %v681 = vpow.pop %v680
        %v682 = vmul.f32 %v676, 1.442695
        %v683 = vpow.pop %v682
        %v684 = vmul.f32 %v677, 1.442695
        %v685 = vpow.pop %v684
        %686 = vadd.xlane.f32.xlu0 %v679
        %v687 = vpop.xlane.xlu0 %686
        %688 = vadd.xlane.f32.xlu0 %v681
        %v689 = vpop.xlane.xlu0 %688
        %690 = vadd.xlane.f32.xlu0 %v683
        %v691 = vpop.xlane.xlu0 %690
        %692 = vadd.xlane.f32.xlu0 %v685
        %v693 = vpop.xlane.xlu0 %692
        %v694 = vadd.f32 %v687, 1.0
        %v695 = vadd.f32 %v689, 1.0
        %v696 = vadd.f32 %v691, 1.0
        %v697 = vadd.f32 %v693, 1.0
        %v698 = vlog2.pop %v694
        %v699 = vmul.f32 %v698, 0.6931472
        %v700 = vlog2.pop %v695
        %v701 = vmul.f32 %v700, 0.6931472
        %v702 = vlog2.pop %v696
        %v703 = vmul.f32 %v702, 0.6931472
        %v704 = vlog2.pop %v697
        %v705 = vmul.f32 %v704, 0.6931472
        %v706 = vlaneseq
        %v707 = vshrl.u32 %v706, 7
        %v708 = vadd.s32 %v707, 8
        %v709 = vadd.s32 %v707, 16
        %v710 = vadd.s32 %v707, 24
        %v711 = vstv %s217
        %v712 = vadd.s32 %v711, %v707
        %v713 = vadd.s32 %v711, %v708
        %v714 = vadd.s32 %v711, %v709
        %v715 = vadd.s32 %v711, %v710
        %vm716 = vcmp.lt.s32.totalorder %v712, 100
        %vm717 = vcmp.lt.s32.totalorder %v713, 100
        %vm718 = vcmp.lt.s32.totalorder %v714, 100
        %vm719 = vcmp.lt.s32.totalorder %v715, 100
        %v720 = vsel %vm716, %v699, 0.0
        %v721 = vsel %vm717, %v701, 0.0
        %v722 = vsel %vm718, %v703, 0.0
        %v723 = vsel %vm719, %v705, 0.0
        %v724 = vadd.f32 %v720, %v721
        %v725 = vadd.f32 %v724, %v722
        %v726 = vadd.f32 %v725, %v723
        %v727 = vrot.slane %v726, 4
        %v728 = vadd.f32 %v726, %v727
        %v729 = vrot.slane %v728, 2
        %v730 = vadd.f32 %v728, %v729
        %v731 = vrot.slane %v730, 1
        %v732 = vadd.f32 %v730, %v731
        %v733 = vadd.f32 %v732, 0.0
        %v734 = vld [vmem:[%s201 + $0x20] sm:$0xff]
        %v735 = vld [vmem:[%s201 + $0x28] sm:$0xff]
        %v736 = vld [vmem:[%s201 + $0x30] sm:$0xff]
        %v737 = vld [vmem:[%s201 + $0x38] sm:$0xff]
        %v738 = vld [vmem:[%s207 + $0x20] sm:$0xff]
        %v739 = vld [vmem:[%s207 + $0x28] sm:$0xff]
        %v740 = vld [vmem:[%s207 + $0x30] sm:$0xff]
        %v741 = vld [vmem:[%s207 + $0x38] sm:$0xff]
        %v742 = vld [vmem:[%s213 + $0x20] sm:$0xff]
        %v743 = vld [vmem:[%s213 + $0x28] sm:$0xff]
        %v744 = vld [vmem:[%s213 + $0x30] sm:$0xff]
        %v745 = vld [vmem:[%s213 + $0x38] sm:$0xff]
        %746 = vset.pattern.permute.xlu0 0
        %747 = vperm.xlu0 %746, %v738
        %v748 = vpop.permute.xlu0 %747
        %749 = vset.pattern.permute.xlu0 0
        %750 = vperm.xlu0 %749, %v739
        %v751 = vpop.permute.xlu0 %750
        %752 = vset.pattern.permute.xlu0 0
        %753 = vperm.xlu0 %752, %v740
        %v754 = vpop.permute.xlu0 %753
        %755 = vset.pattern.permute.xlu0 0
        %756 = vperm.xlu0 %755, %v741
        %v757 = vpop.permute.xlu0 %756
        %vm758 = vcmp.eq.s32.totalorder %v216, %v748
        %vm759 = vcmp.eq.s32.totalorder %v216, %v751
        %vm760 = vcmp.eq.s32.totalorder %v216, %v754
        %vm761 = vcmp.eq.s32.totalorder %v216, %v757
        %762 = vmax.xlane.f32.xlu0 %v734
        %v763 = vpop.xlane.xlu0 %762
        %764 = vmax.xlane.f32.xlu0 %v735
        %v765 = vpop.xlane.xlu0 %764
        %766 = vmax.xlane.f32.xlu0 %v736
        %v767 = vpop.xlane.xlu0 %766
        %768 = vmax.xlane.f32.xlu0 %v737
        %v769 = vpop.xlane.xlu0 %768
        %vm770 = vcmp.eq.f32.partialorder %v734, %v763
        %vm771 = vcmp.eq.f32.partialorder %v735, %v765
        %vm772 = vcmp.eq.f32.partialorder %v736, %v767
        %vm773 = vcmp.eq.f32.partialorder %v737, %v769
        %v774 = vsel %vm770, %v216, 4294967295
        %v775 = vsel %vm771, %v216, 4294967295
        %v776 = vsel %vm772, %v216, 4294967295
        %v777 = vsel %vm773, %v216, 4294967295
        %v778 = vand.u32 %v774, 65535
        %v779 = vshra.s32 %v774, 16
        %v780 = vcvt.s32.f32 %v778
        %v781 = vcvt.s32.f32 %v779
        %782 = vmax.xlane.f32.xlu0 %v781
        %v783 = vpop.xlane.xlu0 %782
        %vm784 = vcmp.eq.f32.partialorder %v781, %v783
        %v785 = vsel %vm784, %v780, -inf
        %786 = vmax.xlane.f32.xlu0 %v785
        %v787 = vpop.xlane.xlu0 %786
        %v788 = vcvt.f32.s32 %v787
        %v789 = vcvt.f32.s32 %v783
        %v790 = vshll.u32 %v789, 16
        %v791 = vadd.s32 %v790, %v788
        %v792 = vand.u32 %v775, 65535
        %v793 = vshra.s32 %v775, 16
        %v794 = vcvt.s32.f32 %v792
        %v795 = vcvt.s32.f32 %v793
        %796 = vmax.xlane.f32.xlu0 %v795
        %v797 = vpop.xlane.xlu0 %796
        %vm798 = vcmp.eq.f32.partialorder %v795, %v797
        %v799 = vsel %vm798, %v794, -inf
        %800 = vmax.xlane.f32.xlu0 %v799
        %v801 = vpop.xlane.xlu0 %800
        %v802 = vcvt.f32.s32 %v801
        %v803 = vcvt.f32.s32 %v797
        %v804 = vshll.u32 %v803, 16
        %v805 = vadd.s32 %v804, %v802
        %v806 = vand.u32 %v776, 65535
        %v807 = vshra.s32 %v776, 16
        %v808 = vcvt.s32.f32 %v806
        %v809 = vcvt.s32.f32 %v807
        %810 = vmax.xlane.f32.xlu0 %v809
        %v811 = vpop.xlane.xlu0 %810
        %vm812 = vcmp.eq.f32.partialorder %v809, %v811
        %v813 = vsel %vm812, %v808, -inf
        %814 = vmax.xlane.f32.xlu0 %v813
        %v815 = vpop.xlane.xlu0 %814
        %v816 = vcvt.f32.s32 %v815
        %v817 = vcvt.f32.s32 %v811
        %v818 = vshll.u32 %v817, 16
        %v819 = vadd.s32 %v818, %v816
        %v820 = vand.u32 %v777, 65535
        %v821 = vshra.s32 %v777, 16
        %v822 = vcvt.s32.f32 %v820
        %v823 = vcvt.s32.f32 %v821
        %824 = vmax.xlane.f32.xlu0 %v823
        %v825 = vpop.xlane.xlu0 %824
        %vm826 = vcmp.eq.f32.partialorder %v823, %v825
        %v827 = vsel %vm826, %v822, -inf
        %828 = vmax.xlane.f32.xlu0 %v827
        %v829 = vpop.xlane.xlu0 %828
        %v830 = vcvt.f32.s32 %v829
        %v831 = vcvt.f32.s32 %v825
        %v832 = vshll.u32 %v831, 16
        %v833 = vadd.s32 %v832, %v830
        %vm834 = vcmp.eq.s32.totalorder %v216, %v791
        %vm835 = vcmp.eq.s32.totalorder %v216, %v805
        %vm836 = vcmp.eq.s32.totalorder %v216, %v819
        %vm837 = vcmp.eq.s32.totalorder %v216, %v833
        %v838 = vsel %vm834, -inf, %v734
        %v839 = vsel %vm835, -inf, %v735
        %v840 = vsel %vm836, -inf, %v736
        %v841 = vsel %vm837, -inf, %v737
        %842 = vmax.xlane.f32.xlu0 %v838
        %v843 = vpop.xlane.xlu0 %842
        %844 = vmax.xlane.f32.xlu0 %v839
        %v845 = vpop.xlane.xlu0 %844
        %846 = vmax.xlane.f32.xlu0 %v840
        %v847 = vpop.xlane.xlu0 %846
        %848 = vmax.xlane.f32.xlu0 %v841
        %v849 = vpop.xlane.xlu0 %848
        %vm850 = vcmp.eq.f32.partialorder %v838, %v843
        %vm851 = vcmp.eq.f32.partialorder %v839, %v845
        %vm852 = vcmp.eq.f32.partialorder %v840, %v847
        %vm853 = vcmp.eq.f32.partialorder %v841, %v849
        %v854 = vsel %vm850, %v216, 4294967295
        %v855 = vsel %vm851, %v216, 4294967295
        %v856 = vsel %vm852, %v216, 4294967295
        %v857 = vsel %vm853, %v216, 4294967295
        %v858 = vand.u32 %v854, 65535
        %v859 = vshra.s32 %v854, 16
        %v860 = vcvt.s32.f32 %v858
        %v861 = vcvt.s32.f32 %v859
        %862 = vmax.xlane.f32.xlu0 %v861
        %v863 = vpop.xlane.xlu0 %862
        %vm864 = vcmp.eq.f32.partialorder %v861, %v863
        %v865 = vsel %vm864, %v860, -inf
        %866 = vmax.xlane.f32.xlu0 %v865
        %v867 = vpop.xlane.xlu0 %866
        %v868 = vcvt.f32.s32 %v867
        %v869 = vcvt.f32.s32 %v863
        %v870 = vshll.u32 %v869, 16
        %v871 = vadd.s32 %v870, %v868
        %v872 = vand.u32 %v855, 65535
        %v873 = vshra.s32 %v855, 16
        %v874 = vcvt.s32.f32 %v872
        %v875 = vcvt.s32.f32 %v873
        %876 = vmax.xlane.f32.xlu0 %v875
        %v877 = vpop.xlane.xlu0 %876
        %vm878 = vcmp.eq.f32.partialorder %v875, %v877
        %v879 = vsel %vm878, %v874, -inf
        %880 = vmax.xlane.f32.xlu0 %v879
        %v881 = vpop.xlane.xlu0 %880
        %v882 = vcvt.f32.s32 %v881
        %v883 = vcvt.f32.s32 %v877
        %v884 = vshll.u32 %v883, 16
        %v885 = vadd.s32 %v884, %v882
        %v886 = vand.u32 %v856, 65535
        %v887 = vshra.s32 %v856, 16
        %v888 = vcvt.s32.f32 %v886
        %v889 = vcvt.s32.f32 %v887
        %890 = vmax.xlane.f32.xlu0 %v889
        %v891 = vpop.xlane.xlu0 %890
        %vm892 = vcmp.eq.f32.partialorder %v889, %v891
        %v893 = vsel %vm892, %v888, -inf
        %894 = vmax.xlane.f32.xlu0 %v893
        %v895 = vpop.xlane.xlu0 %894
        %v896 = vcvt.f32.s32 %v895
        %v897 = vcvt.f32.s32 %v891
        %v898 = vshll.u32 %v897, 16
        %v899 = vadd.s32 %v898, %v896
        %v900 = vand.u32 %v857, 65535
        %v901 = vshra.s32 %v857, 16
        %v902 = vcvt.s32.f32 %v900
        %v903 = vcvt.s32.f32 %v901
        %904 = vmax.xlane.f32.xlu0 %v903
        %v905 = vpop.xlane.xlu0 %904
        %vm906 = vcmp.eq.f32.partialorder %v903, %v905
        %v907 = vsel %vm906, %v902, -inf
        %908 = vmax.xlane.f32.xlu0 %v907
        %v909 = vpop.xlane.xlu0 %908
        %v910 = vcvt.f32.s32 %v909
        %v911 = vcvt.f32.s32 %v905
        %v912 = vshll.u32 %v911, 16
        %v913 = vadd.s32 %v912, %v910
        %vm914 = vcmp.eq.s32.totalorder %v216, %v871
        %vm915 = vcmp.eq.s32.totalorder %v216, %v885
        %vm916 = vcmp.eq.s32.totalorder %v216, %v899
        %vm917 = vcmp.eq.s32.totalorder %v216, %v913
        %v918 = vsel %vm914, -inf, %v838
        %v919 = vsel %vm915, -inf, %v839
        %v920 = vsel %vm916, -inf, %v840
        %v921 = vsel %vm917, -inf, %v841
        %922 = vmax.xlane.f32.xlu0 %v918
        %v923 = vpop.xlane.xlu0 %922
        %924 = vmax.xlane.f32.xlu0 %v919
        %v925 = vpop.xlane.xlu0 %924
        %926 = vmax.xlane.f32.xlu0 %v920
        %v927 = vpop.xlane.xlu0 %926
        %928 = vmax.xlane.f32.xlu0 %v921
        %v929 = vpop.xlane.xlu0 %928
        %vm930 = vcmp.eq.f32.partialorder %v918, %v923
        %vm931 = vcmp.eq.f32.partialorder %v919, %v925
        %vm932 = vcmp.eq.f32.partialorder %v920, %v927
        %vm933 = vcmp.eq.f32.partialorder %v921, %v929
        %v934 = vsel %vm930, %v216, 4294967295
        %v935 = vsel %vm931, %v216, 4294967295
        %v936 = vsel %vm932, %v216, 4294967295
        %v937 = vsel %vm933, %v216, 4294967295
        %v938 = vand.u32 %v934, 65535
        %v939 = vshra.s32 %v934, 16
        %v940 = vcvt.s32.f32 %v938
        %v941 = vcvt.s32.f32 %v939
        %942 = vmax.xlane.f32.xlu0 %v941
        %v943 = vpop.xlane.xlu0 %942
        %vm944 = vcmp.eq.f32.partialorder %v941, %v943
        %v945 = vsel %vm944, %v940, -inf
        %946 = vmax.xlane.f32.xlu0 %v945
        %v947 = vpop.xlane.xlu0 %946
        %v948 = vcvt.f32.s32 %v947
        %v949 = vcvt.f32.s32 %v943
        %v950 = vshll.u32 %v949, 16
        %v951 = vadd.s32 %v950, %v948
        %v952 = vand.u32 %v935, 65535
        %v953 = vshra.s32 %v935, 16
        %v954 = vcvt.s32.f32 %v952
        %v955 = vcvt.s32.f32 %v953
        %956 = vmax.xlane.f32.xlu0 %v955
        %v957 = vpop.xlane.xlu0 %956
        %vm958 = vcmp.eq.f32.partialorder %v955, %v957
        %v959 = vsel %vm958, %v954, -inf
        %960 = vmax.xlane.f32.xlu0 %v959
        %v961 = vpop.xlane.xlu0 %960
        %v962 = vcvt.f32.s32 %v961
        %v963 = vcvt.f32.s32 %v957
        %v964 = vshll.u32 %v963, 16
        %v965 = vadd.s32 %v964, %v962
        %v966 = vand.u32 %v936, 65535
        %v967 = vshra.s32 %v936, 16
        %v968 = vcvt.s32.f32 %v966
        %v969 = vcvt.s32.f32 %v967
        %970 = vmax.xlane.f32.xlu0 %v969
        %v971 = vpop.xlane.xlu0 %970
        %vm972 = vcmp.eq.f32.partialorder %v969, %v971
        %v973 = vsel %vm972, %v968, -inf
        %974 = vmax.xlane.f32.xlu0 %v973
        %v975 = vpop.xlane.xlu0 %974
        %v976 = vcvt.f32.s32 %v975
        %v977 = vcvt.f32.s32 %v971
        %v978 = vshll.u32 %v977, 16
        %v979 = vadd.s32 %v978, %v976
        %v980 = vand.u32 %v937, 65535
        %v981 = vshra.s32 %v937, 16
        %v982 = vcvt.s32.f32 %v980
        %v983 = vcvt.s32.f32 %v981
        %984 = vmax.xlane.f32.xlu0 %v983
        %v985 = vpop.xlane.xlu0 %984
        %vm986 = vcmp.eq.f32.partialorder %v983, %v985
        %v987 = vsel %vm986, %v982, -inf
        %988 = vmax.xlane.f32.xlu0 %v987
        %v989 = vpop.xlane.xlu0 %988
        %v990 = vcvt.f32.s32 %v989
        %v991 = vcvt.f32.s32 %v985
        %v992 = vshll.u32 %v991, 16
        %v993 = vadd.s32 %v992, %v990
        %vm994 = vcmp.eq.s32.totalorder %v216, %v951
        %vm995 = vcmp.eq.s32.totalorder %v216, %v965
        %vm996 = vcmp.eq.s32.totalorder %v216, %v979
        %vm997 = vcmp.eq.s32.totalorder %v216, %v993
        %v998 = vsel %vm994, -inf, %v918
        %v999 = vsel %vm995, -inf, %v919
        %v1000 = vsel %vm996, -inf, %v920
        %v1001 = vsel %vm997, -inf, %v921
        %1002 = vmax.xlane.f32.xlu0 %v998
        %v1003 = vpop.xlane.xlu0 %1002
        %1004 = vmax.xlane.f32.xlu0 %v999
        %v1005 = vpop.xlane.xlu0 %1004
        %1006 = vmax.xlane.f32.xlu0 %v1000
        %v1007 = vpop.xlane.xlu0 %1006
        %1008 = vmax.xlane.f32.xlu0 %v1001
        %v1009 = vpop.xlane.xlu0 %1008
        %vm1010 = vcmp.eq.f32.partialorder %v998, %v1003
        %vm1011 = vcmp.eq.f32.partialorder %v999, %v1005
        %vm1012 = vcmp.eq.f32.partialorder %v1000, %v1007
        %vm1013 = vcmp.eq.f32.partialorder %v1001, %v1009
        %v1014 = vsel %vm1010, %v216, 4294967295
        %v1015 = vsel %vm1011, %v216, 4294967295
        %v1016 = vsel %vm1012, %v216, 4294967295
        %v1017 = vsel %vm1013, %v216, 4294967295
        %v1018 = vand.u32 %v1014, 65535
        %v1019 = vshra.s32 %v1014, 16
        %v1020 = vcvt.s32.f32 %v1018
        %v1021 = vcvt.s32.f32 %v1019
        %1022 = vmax.xlane.f32.xlu0 %v1021
        %v1023 = vpop.xlane.xlu0 %1022
        %vm1024 = vcmp.eq.f32.partialorder %v1021, %v1023
        %v1025 = vsel %vm1024, %v1020, -inf
        %1026 = vmax.xlane.f32.xlu0 %v1025
        %v1027 = vpop.xlane.xlu0 %1026
        %v1028 = vcvt.f32.s32 %v1027
        %v1029 = vcvt.f32.s32 %v1023
        %v1030 = vshll.u32 %v1029, 16
        %v1031 = vadd.s32 %v1030, %v1028
        %v1032 = vand.u32 %v1015, 65535
        %v1033 = vshra.s32 %v1015, 16
        %v1034 = vcvt.s32.f32 %v1032
        %v1035 = vcvt.s32.f32 %v1033
        %1036 = vmax.xlane.f32.xlu0 %v1035
        %v1037 = vpop.xlane.xlu0 %1036
        %vm1038 = vcmp.eq.f32.partialorder %v1035, %v1037
        %v1039 = vsel %vm1038, %v1034, -inf
        %1040 = vmax.xlane.f32.xlu0 %v1039
        %v1041 = vpop.xlane.xlu0 %1040
        %v1042 = vcvt.f32.s32 %v1041
        %v1043 = vcvt.f32.s32 %v1037
        %v1044 = vshll.u32 %v1043, 16
        %v1045 = vadd.s32 %v1044, %v1042
        %v1046 = vand.u32 %v1016, 65535
        %v1047 = vshra.s32 %v1016, 16
        %v1048 = vcvt.s32.f32 %v1046
        %v1049 = vcvt.s32.f32 %v1047
        %1050 = vmax.xlane.f32.xlu0 %v1049
        %v1051 = vpop.xlane.xlu0 %1050
        %vm1052 = vcmp.eq.f32.partialorder %v1049, %v1051
        %v1053 = vsel %vm1052, %v1048, -inf
        %1054 = vmax.xlane.f32.xlu0 %v1053
        %v1055 = vpop.xlane.xlu0 %1054
        %v1056 = vcvt.f32.s32 %v1055
        %v1057 = vcvt.f32.s32 %v1051
        %v1058 = vshll.u32 %v1057, 16
        %v1059 = vadd.s32 %v1058, %v1056
        %v1060 = vand.u32 %v1017, 65535
        %v1061 = vshra.s32 %v1017, 16
        %v1062 = vcvt.s32.f32 %v1060
        %v1063 = vcvt.s32.f32 %v1061
        %1064 = vmax.xlane.f32.xlu0 %v1063
        %v1065 = vpop.xlane.xlu0 %1064
        %vm1066 = vcmp.eq.f32.partialorder %v1063, %v1065
        %v1067 = vsel %vm1066, %v1062, -inf
        %1068 = vmax.xlane.f32.xlu0 %v1067
        %v1069 = vpop.xlane.xlu0 %1068
        %v1070 = vcvt.f32.s32 %v1069
        %v1071 = vcvt.f32.s32 %v1065
        %v1072 = vshll.u32 %v1071, 16
        %v1073 = vadd.s32 %v1072, %v1070
        %vm1074 = vcmp.eq.s32.totalorder %v216, %v1031
        %vm1075 = vcmp.eq.s32.totalorder %v216, %v1045
        %vm1076 = vcmp.eq.s32.totalorder %v216, %v1059
        %vm1077 = vcmp.eq.s32.totalorder %v216, %v1073
        %v1078 = vsel %vm1074, -inf, %v998
        %v1079 = vsel %vm1075, -inf, %v999
        %v1080 = vsel %vm1076, -inf, %v1000
        %v1081 = vsel %vm1077, -inf, %v1001
        %1082 = vmax.xlane.f32.xlu0 %v1078
        %v1083 = vpop.xlane.xlu0 %1082
        %1084 = vmax.xlane.f32.xlu0 %v1079
        %v1085 = vpop.xlane.xlu0 %1084
        %1086 = vmax.xlane.f32.xlu0 %v1080
        %v1087 = vpop.xlane.xlu0 %1086
        %1088 = vmax.xlane.f32.xlu0 %v1081
        %v1089 = vpop.xlane.xlu0 %1088
        %vm1090 = vcmp.eq.f32.partialorder %v1078, %v1083
        %vm1091 = vcmp.eq.f32.partialorder %v1079, %v1085
        %vm1092 = vcmp.eq.f32.partialorder %v1080, %v1087
        %vm1093 = vcmp.eq.f32.partialorder %v1081, %v1089
        %v1094 = vsel %vm1090, %v216, 4294967295
        %v1095 = vsel %vm1091, %v216, 4294967295
        %v1096 = vsel %vm1092, %v216, 4294967295
        %v1097 = vsel %vm1093, %v216, 4294967295
        %v1098 = vand.u32 %v1094, 65535
        %v1099 = vshra.s32 %v1094, 16
        %v1100 = vcvt.s32.f32 %v1098
        %v1101 = vcvt.s32.f32 %v1099
        %1102 = vmax.xlane.f32.xlu0 %v1101
        %v1103 = vpop.xlane.xlu0 %1102
        %vm1104 = vcmp.eq.f32.partialorder %v1101, %v1103
        %v1105 = vsel %vm1104, %v1100, -inf
        %1106 = vmax.xlane.f32.xlu0 %v1105
        %v1107 = vpop.xlane.xlu0 %1106
        %v1108 = vcvt.f32.s32 %v1107
        %v1109 = vcvt.f32.s32 %v1103
        %v1110 = vshll.u32 %v1109, 16
        %v1111 = vadd.s32 %v1110, %v1108
        %v1112 = vand.u32 %v1095, 65535
        %v1113 = vshra.s32 %v1095, 16
        %v1114 = vcvt.s32.f32 %v1112
        %v1115 = vcvt.s32.f32 %v1113
        %1116 = vmax.xlane.f32.xlu0 %v1115
        %v1117 = vpop.xlane.xlu0 %1116
        %vm1118 = vcmp.eq.f32.partialorder %v1115, %v1117
        %v1119 = vsel %vm1118, %v1114, -inf
        %1120 = vmax.xlane.f32.xlu0 %v1119
        %v1121 = vpop.xlane.xlu0 %1120
        %v1122 = vcvt.f32.s32 %v1121
        %v1123 = vcvt.f32.s32 %v1117
        %v1124 = vshll.u32 %v1123, 16
        %v1125 = vadd.s32 %v1124, %v1122
        %v1126 = vand.u32 %v1096, 65535
        %v1127 = vshra.s32 %v1096, 16
        %v1128 = vcvt.s32.f32 %v1126
        %v1129 = vcvt.s32.f32 %v1127
        %1130 = vmax.xlane.f32.xlu0 %v1129
        %v1131 = vpop.xlane.xlu0 %1130
        %vm1132 = vcmp.eq.f32.partialorder %v1129, %v1131
        %v1133 = vsel %vm1132, %v1128, -inf
        %1134 = vmax.xlane.f32.xlu0 %v1133
        %v1135 = vpop.xlane.xlu0 %1134
        %v1136 = vcvt.f32.s32 %v1135
        %v1137 = vcvt.f32.s32 %v1131
        %v1138 = vshll.u32 %v1137, 16
        %v1139 = vadd.s32 %v1138, %v1136
        %v1140 = vand.u32 %v1097, 65535
        %v1141 = vshra.s32 %v1097, 16
        %v1142 = vcvt.s32.f32 %v1140
        %v1143 = vcvt.s32.f32 %v1141
        %1144 = vmax.xlane.f32.xlu0 %v1143
        %v1145 = vpop.xlane.xlu0 %1144
        %vm1146 = vcmp.eq.f32.partialorder %v1143, %v1145
        %v1147 = vsel %vm1146, %v1142, -inf
        %1148 = vmax.xlane.f32.xlu0 %v1147
        %v1149 = vpop.xlane.xlu0 %1148
        %v1150 = vcvt.f32.s32 %v1149
        %v1151 = vcvt.f32.s32 %v1145
        %v1152 = vshll.u32 %v1151, 16
        %v1153 = vadd.s32 %v1152, %v1150
        %vm1154 = vcmp.eq.s32.totalorder %v216, %v1111
        %vm1155 = vcmp.eq.s32.totalorder %v216, %v1125
        %vm1156 = vcmp.eq.s32.totalorder %v216, %v1139
        %vm1157 = vcmp.eq.s32.totalorder %v216, %v1153
        %v1158 = vsel %vm1154, -inf, %v1078
        %v1159 = vsel %vm1155, -inf, %v1079
        %v1160 = vsel %vm1156, -inf, %v1080
        %v1161 = vsel %vm1157, -inf, %v1081
        %1163 = vset.pattern.permute.xlu0 0
        %1164 = vperm.xlu0 %1163, %v742
        %v1165 = vpop.permute.xlu0 %1164
        %1168 = vset.pattern.permute.xlu0 0
        %1169 = vperm.xlu0 %1168, %v743
        %v1170 = vpop.permute.xlu0 %1169
        %1173 = vset.pattern.permute.xlu0 0
        %1174 = vperm.xlu0 %1173, %v744
        %v1175 = vpop.permute.xlu0 %1174
        %1178 = vset.pattern.permute.xlu0 0
        %1179 = vperm.xlu0 %1178, %v745
        %v1180 = vpop.permute.xlu0 %1179
        %v1182 = vsub.f32 %v1158, %v1165
        %v1183 = vsub.f32 %v1159, %v1170
        %v1184 = vsub.f32 %v1160, %v1175
        %v1185 = vsub.f32 %v1161, %v1180
        %v1186 = vmin.f32 %v1182, 80.0
        %v1187 = vmin.f32 %v1183, 80.0
        %v1188 = vmin.f32 %v1184, 80.0
        %v1189 = vmin.f32 %v1185, 80.0
        %v1190 = vsel %vm758, -inf, %v1186
        %v1191 = vsel %vm759, -inf, %v1187
        %v1192 = vsel %vm760, -inf, %v1188
        %v1193 = vsel %vm761, -inf, %v1189
        %v1194 = vmul.f32 %v1190, 1.442695
        %v1195 = vpow.pop %v1194
        %v1196 = vmul.f32 %v1191, 1.442695
        %v1197 = vpow.pop %v1196
        %v1198 = vmul.f32 %v1192, 1.442695
        %v1199 = vpow.pop %v1198
        %v1200 = vmul.f32 %v1193, 1.442695
        %v1201 = vpow.pop %v1200
        %1202 = vadd.xlane.f32.xlu0 %v1195
        %v1203 = vpop.xlane.xlu0 %1202
        %1204 = vadd.xlane.f32.xlu0 %v1197
        %v1205 = vpop.xlane.xlu0 %1204
        %1206 = vadd.xlane.f32.xlu0 %v1199
        %v1207 = vpop.xlane.xlu0 %1206
        %1208 = vadd.xlane.f32.xlu0 %v1201
        %v1209 = vpop.xlane.xlu0 %1208
        %v1210 = vadd.f32 %v1203, 1.0
        %v1211 = vadd.f32 %v1205, 1.0
        %v1212 = vadd.f32 %v1207, 1.0
        %v1213 = vadd.f32 %v1209, 1.0
        %v1214 = vlog2.pop %v1210
        %v1215 = vmul.f32 %v1214, 0.6931472
        %v1216 = vlog2.pop %v1211
        %v1217 = vmul.f32 %v1216, 0.6931472
        %v1218 = vlog2.pop %v1212
        %v1219 = vmul.f32 %v1218, 0.6931472
        %v1220 = vlog2.pop %v1213
        %v1221 = vmul.f32 %v1220, 0.6931472
        %s1222 = sadd.s32 %s217, 32
        %v1223 = vstv %s1222
        %v1224 = vadd.s32 %v1223, %v707
        %v1225 = vadd.s32 %v1223, %v708
        %v1226 = vadd.s32 %v1223, %v709
        %v1227 = vadd.s32 %v1223, %v710
        %vm1228 = vcmp.lt.s32.totalorder %v1224, 100
        %vm1229 = vcmp.lt.s32.totalorder %v1225, 100
        %vm1230 = vcmp.lt.s32.totalorder %v1226, 100
        %vm1231 = vcmp.lt.s32.totalorder %v1227, 100
        %v1232 = vsel %vm1228, %v1215, 0.0
        %v1233 = vsel %vm1229, %v1217, 0.0
        %v1234 = vsel %vm1230, %v1219, 0.0
        %v1235 = vsel %vm1231, %v1221, 0.0
        %v1236 = vadd.f32 %v1232, %v1233
        %v1237 = vadd.f32 %v1236, %v1234
        %v1238 = vadd.f32 %v1237, %v1235
        %v1239 = vrot.slane %v1238, 4
        %v1240 = vadd.f32 %v1238, %v1239
        %v1241 = vrot.slane %v1240, 2
        %v1242 = vadd.f32 %v1240, %v1241
        %v1243 = vrot.slane %v1242, 1
        %v1244 = vadd.f32 %v1242, %v1243
        %v1245 = vadd.f32 %v733, %v1244
        %vm1246 = vcmp.eq.s32.totalorder %v707, 0
        %vm1247 = vcmp.eq.s32.totalorder %v216, 0
        %vm1248 = vmand %vm1246, %vm1247
        %v1249 = vsel %vm1248, %v1245, 0.0
        %1250 = vst [vmem:[%s196] sm:$0xff] %v1249
        %s1251 = sand.u32 %s103, 1
        %s1252 = scalar_lea.sflag [#allocation3], %s1251
        %s1253 = sand.u32 %s103, 1
        %s1254 = smul.addr %s1253, 8
        %s1255 = scalar_lea.vmem [#allocation2], %s1254
        // Predicated region
        $region33: #{tpu_custom_call.1} parent=31 // pred_check
          %p1256 = pneg %p113
        $region34: #{tpu_custom_call.1} parent=31 // pred_check_branch
          %1258 = sbr.rel (%p1256) target = $region36
        $region35: #{tpu_custom_call.1} parent=31 // pred_region
          %s1260 = ssub.s32 128, 128
          %1261 = vsyncadd %s1252, %s1260
          %s1262 = smul.addr %s17, 128
          %s1263 = scalar_lea.hbm %s3, %s1262
          %s1265 = sshll.u32 %s1255, 4
          %s1266 = int_to_ptr.vmem [resolvable:$true] %s1265
          %1268 = dma.vmem_to_hbm [thread:$0]  %s1266, 128, %s1263, %s1252
        $region36: #{tpu_custom_call.1} parent=31 // pred_fallthru
          _
      $region32: #{tpu_custom_call.1} parent=5 // pred_fallthru
        _
      %p1269 = scmp.le.s32.totalorder 2, %s12
      // Predicated region
      $region37: #{tpu_custom_call.1} parent=5 // pred_check
        %p1270 = pneg %p1269
      $region38: #{tpu_custom_call.1} parent=5 // pred_check_branch
        %1272 = sbr.rel (%p1270) target = $region40
      $region39: #{tpu_custom_call.1} parent=5 // pred_region
        %s1273 = ssub.s32 %s12, 2
        // Predicated region
        $region41: #{tpu_custom_call.1} parent=39 // pred_check
          %p1274 = pneg %p119
        $region42: #{tpu_custom_call.1} parent=39 // pred_check_branch
          %1276 = sbr.rel (%p1274) target = $region44
        $region43: #{tpu_custom_call.1} parent=39 // pred_region
          %s1277 = sand.u32 %s104, 1
          %s1278 = scalar_lea.sflag [#allocation3], %s1277
          %s1279 = sand.u32 %s104, 1
          %s1280 = smul.addr %s1279, 8
          %s1281 = scalar_lea.vmem [#allocation2], %s1280
          %1282 = dma.done %s1278, 128
        $region44: #{tpu_custom_call.1} parent=39 // pred_fallthru
          _
      $region40: #{tpu_custom_call.1} parent=5 // pred_fallthru
        _
    $region6: #{tpu_custom_call.1} parent=1 // loop_footer
      %s16 = sadd.s32 1, %s12
    $region7: #{tpu_custom_call.1} parent=1 // loop_footer_branch
      %11 = sbr.rel target = $region3
    $region8: #{tpu_custom_call.1} parent=1 // loop_exit
      _
    %1283 = vsyncpa [#allocation3], 1
    %s1284 = scalar_lea.sflag [#allocation3], 1
    %1285 = vsyncpa %s1284, 1

</llo_original>
